<compile_context>
chip_gen: v6e
topology: v6e:2x2x1
jax: 0.10.0
libtpu: 0.0.40
codegen_flags: <defaults>
</compile_context>

<pallas_src>
import jax
import jax.numpy as jnp
from jax import lax
from jax.experimental import pallas as pl
from jax.experimental.pallas import tpu as pltpu

# Layer sizes of IrisBCModel.
D_IN, D_H1, D_H2, D_OUT = 4, 20, 10, 1

# Static offsets into the packed 1-D parameter vector (PyTorch (out, in) row-major order).
_OFF_W1 = 0
_OFF_B1 = _OFF_W1 + D_H1 * D_IN        # 80
_OFF_W2 = _OFF_B1 + D_H1               # 100
_OFF_B2 = _OFF_W2 + D_H2 * D_H1        # 300
_OFF_W3 = _OFF_B2 + D_H2               # 310
_OFF_B3 = _OFF_W3 + D_OUT * D_H2       # 320
N_PARAMS = _OFF_B3 + D_OUT             # 321

_SUB = 8      # sublanes per tile (and per chunk)
_LANE = 128   # lanes per chunk -> one (8,128) f32 vreg per intermediate "row"


def iris_bc_kernel(p_ref, x_ref, o_ref):
    """One batch tile.

    p_ref: f32[N_PARAMS] SMEM      -- packed W1,b1,W2,b2,W3,b3; scalar reads.
    x_ref: f32[4, 8, tb_l] VMEM    -- features on the leading axis, batch spread over
                                      (sublane, lane) so every vreg is dense.
    o_ref: f32[8, tb_l] VMEM       -- lane-dense sigmoid outputs for this tile.
    """
    # ---- Hoisted scalar parameter reads: once per grid step, NOT per chunk. ----
    w1 = [[p_ref[_OFF_W1 + n * D_IN + k] for k in range(D_IN)] for n in range(D_H1)]
    b1 = [p_ref[_OFF_B1 + n] for n in range(D_H1)]
    w2 = [[p_ref[_OFF_W2 + n * D_H1 + k] for k in range(D_H1)] for n in range(D_H2)]
    b2 = [p_ref[_OFF_B2 + n] for n in range(D_H2)]
    w3 = [p_ref[_OFF_W3 + k] for k in range(D_H2)]
    b3 = p_ref[_OFF_B3]

    n_chunks = o_ref.shape[1] // _LANE   # static Python int (block shape is static)

    def chunk_body(c, carry):
        # One (8,128) vreg chunk of the batch tile; live set stays ~34 vregs.
        l0 = pl.multiple_of(c * _LANE, _LANE)

        x_rows = [x_ref[k, :, pl.ds(l0, _LANE)] for k in range(D_IN)]    # 4 vregs

        # Layer 1: 4 -> 20, ReLU. Pure VPU broadcast-FMA, fully unrolled.
        h1 = []
        for n in range(D_H1):
            acc = x_rows[0] * w1[n][0] + b1[n]
            for k in range(1, D_IN):
                acc = acc + x_rows[k] * w1[n][k]
            h1.append(jnp.maximum(acc, 0.0))

        # Layer 2: 20 -> 10, ReLU.
        h2 = []
        for n in range(D_H2):
            acc = h1[0] * w2[n][0] + b2[n]
            for k in range(1, D_H1):
                acc = acc + h1[k] * w2[n][k]
            h2.append(jnp.maximum(acc, 0.0))

        # Layer 3: 10 -> 1.
        logit = h2[0] * w3[0] + b3
        for k in range(1, D_H2):
            logit = logit + h2[k] * w3[k]

        # Sigmoid = 1 / (1 + exp(-x)): exp and reciprocal both go to the idle EUP slot.
        prob = pl.reciprocal(1.0 + jnp.exp(-logit), approx=True)
        o_ref[:, pl.ds(l0, _LANE)] = prob                 # unmasked lane-dense store
        return carry

    lax.fori_loop(0, n_chunks, chunk_body, 0)


def _choose_tb_l(b, max_lanes=16384, min_lanes=_LANE):
    """Lanes per tile (sublanes fixed at 8).

    Small batches clamp to one (8,128) vreg; large batches get ~2.5 MiB tiles
    (8 x 16384 rows) while preferring >= 2 grid steps so both v7x TCs get work.
    """
    need_lanes = pl.cdiv(b, _SUB)
    if need_lanes <= min_lanes:
        return min_lanes
    tb_l = min_lanes
    while tb_l * 2 <= need_lanes and tb_l < max_lanes:
        tb_l *= 2
    return tb_l


def iris_bc_forward(x, packed_params, *, tb_l=None):
    """x: (B, 4) float. Returns sigmoid probabilities of shape (B, 1) float32."""
    b = x.shape[0]
    if tb_l is None:
        tb_l = _choose_tb_l(b)
    tile = _SUB * tb_l
    n_tiles = pl.cdiv(b, tile)
    b_pad = n_tiles * tile

    # Layout plumbing (outside the kernel): single pad to a tile multiple (no
    # zeros+scatter full-HBM pass), features on the leading axis, batch spread
    # over (sublane, lane) so every vreg is dense.
    xt = jnp.pad(x.T.astype(jnp.float32), ((0, 0), (0, b_pad - b)))
    xt = xt.reshape(D_IN, n_tiles * _SUB, tb_l)

    out = pl.pallas_call(
        iris_bc_kernel,
        out_shape=jax.ShapeDtypeStruct((n_tiles * _SUB, tb_l), jnp.float32),
        grid=(n_tiles,),
        in_specs=[
            # Packed params: one tiny slab, resident in SMEM for the whole call.
            pl.BlockSpec(memory_space=pltpu.MemorySpace.SMEM),
            # Per-tile batch slab, double-buffered by the pipeline.
            pl.BlockSpec((D_IN, _SUB, tb_l), lambda i: (0, i, 0)),
        ],
        out_specs=pl.BlockSpec((_SUB, tb_l), lambda i: (i, 0)),
        compiler_params=pltpu.CompilerParams(
            dimension_semantics=("parallel",)),
    )(packed_params, xt)

    # Undo the layout plumbing and drop the padded rows.
    return out.reshape(b_pad)[:b][:, None]


def init_params(key):
    """Deterministic init mimicking nn.Linear's Kaiming-uniform-ish bounds.
    Weights stored PyTorch-style as (out_features, in_features)."""
    def linear(key, fan_in, fan_out):
        kw, kb = jax.random.split(key)
        bound = 1.0 / jnp.sqrt(float(fan_in))
        w = jax.random.uniform(kw, (fan_out, fan_in), jnp.float32, -bound, bound)
        b = jax.random.uniform(kb, (fan_out,), jnp.float32, -bound, bound)
        return w, b

    k1, k2, k3 = jax.random.split(key, 3)
    w1, b1 = linear(k1, D_IN, D_H1)
    w2, b2 = linear(k2, D_H1, D_H2)
    w3, b3 = linear(k3, D_H2, D_OUT)
    return (w1, b1, w2, b2, w3, b3)


def pack_params(params):
    w1, b1, w2, b2, w3, b3 = params
    packed = jnp.concatenate([w1.ravel(), b1.ravel(),
                              w2.ravel(), b2.ravel(),
                              w3.ravel(), b3.ravel()]).astype(jnp.float32)
    assert packed.shape == (N_PARAMS,)
    return packed


def reference_forward(x, params):
    w1, b1, w2, b2, w3, b3 = params
    h1 = jax.nn.relu(x @ w1.T + b1)
    h2 = jax.nn.relu(h1 @ w2.T + b2)
    return jax.nn.sigmoid(h2 @ w3.T + b3)


if __name__ == "__main__":
    key = jax.random.PRNGKey(0)
    k_params, k_x = jax.random.split(key)

    params = init_params(k_params)
    packed = pack_params(params)
    x = jax.random.normal(k_x, (8, 4), dtype=jnp.float32)  # batch=8, 4 iris features

    out = jax.block_until_ready(iris_bc_forward(x, packed))
    ref = reference_forward(x, params)

    assert out.shape == (8, 1)
    # Tolerance accounts for the EUP approx-reciprocal in the sigmoid (abs err <~ 4e-4).
    assert jnp.allclose(out, ref, atol=2e-3, rtol=2e-3), (
        f"max abs err {float(jnp.max(jnp.abs(out - ref)))}")

    print("KERNEL_OK")
</pallas_src>

<mosaic_0001>
module attributes {stable_mosaic.version = 11 : i64} {
  func.func @iris_bc_kernel(%arg0: i32, %arg1: memref<321xf32, #tpu.memory_space<smem>>, %arg2: memref<4x8x128xf32, #tpu.memory_space<vmem>>, %arg3: memref<8x128xf32, #tpu.memory_space<vmem>>) attributes {dimension_semantics = [#tpu.dimension_semantics<parallel>], iteration_bounds = array<i64: 1>, scalar_prefetch = 0 : i64, scratch_operands = 0 : i64, tpu.core_type = #tpu.core_type<tc>, window_params = [{transform_indices = @transform_0, window_bounds = array<i64: 321>}, {transform_indices = @transform_1, window_bounds = array<i64: 4, 8, 128>}, {transform_indices = @transform_2, window_bounds = array<i64: 8, 128>}]} {
    %c0 = arith.constant 0 : index
    %0 = memref.load %arg1[%c0] : memref<321xf32, #tpu.memory_space<smem>>
    %c1 = arith.constant 1 : index
    %1 = memref.load %arg1[%c1] : memref<321xf32, #tpu.memory_space<smem>>
    %c2 = arith.constant 2 : index
    %2 = memref.load %arg1[%c2] : memref<321xf32, #tpu.memory_space<smem>>
    %c3 = arith.constant 3 : index
    %3 = memref.load %arg1[%c3] : memref<321xf32, #tpu.memory_space<smem>>
    %c4 = arith.constant 4 : index
    %4 = memref.load %arg1[%c4] : memref<321xf32, #tpu.memory_space<smem>>
    %c5 = arith.constant 5 : index
    %5 = memref.load %arg1[%c5] : memref<321xf32, #tpu.memory_space<smem>>
    %c6 = arith.constant 6 : index
    %6 = memref.load %arg1[%c6] : memref<321xf32, #tpu.memory_space<smem>>
    %c7 = arith.constant 7 : index
    %7 = memref.load %arg1[%c7] : memref<321xf32, #tpu.memory_space<smem>>
    %c8 = arith.constant 8 : index
    %8 = memref.load %arg1[%c8] : memref<321xf32, #tpu.memory_space<smem>>
    %c9 = arith.constant 9 : index
    %9 = memref.load %arg1[%c9] : memref<321xf32, #tpu.memory_space<smem>>
    %c10 = arith.constant 10 : index
    %10 = memref.load %arg1[%c10] : memref<321xf32, #tpu.memory_space<smem>>
    %c11 = arith.constant 11 : index
    %11 = memref.load %arg1[%c11] : memref<321xf32, #tpu.memory_space<smem>>
    %c12 = arith.constant 12 : index
    %12 = memref.load %arg1[%c12] : memref<321xf32, #tpu.memory_space<smem>>
    %c13 = arith.constant 13 : index
    %13 = memref.load %arg1[%c13] : memref<321xf32, #tpu.memory_space<smem>>
    %c14 = arith.constant 14 : index
    %14 = memref.load %arg1[%c14] : memref<321xf32, #tpu.memory_space<smem>>
    %c15 = arith.constant 15 : index
    %15 = memref.load %arg1[%c15] : memref<321xf32, #tpu.memory_space<smem>>
    %c16 = arith.constant 16 : index
    %16 = memref.load %arg1[%c16] : memref<321xf32, #tpu.memory_space<smem>>
    %c17 = arith.constant 17 : index
    %17 = memref.load %arg1[%c17] : memref<321xf32, #tpu.memory_space<smem>>
    %c18 = arith.constant 18 : index
    %18 = memref.load %arg1[%c18] : memref<321xf32, #tpu.memory_space<smem>>
    %c19 = arith.constant 19 : index
    %19 = memref.load %arg1[%c19] : memref<321xf32, #tpu.memory_space<smem>>
    %c20 = arith.constant 20 : index
    %20 = memref.load %arg1[%c20] : memref<321xf32, #tpu.memory_space<smem>>
    %c21 = arith.constant 21 : index
    %21 = memref.load %arg1[%c21] : memref<321xf32, #tpu.memory_space<smem>>
    %c22 = arith.constant 22 : index
    %22 = memref.load %arg1[%c22] : memref<321xf32, #tpu.memory_space<smem>>
    %c23 = arith.constant 23 : index
    %23 = memref.load %arg1[%c23] : memref<321xf32, #tpu.memory_space<smem>>
    %c24 = arith.constant 24 : index
    %24 = memref.load %arg1[%c24] : memref<321xf32, #tpu.memory_space<smem>>
    %c25 = arith.constant 25 : index
    %25 = memref.load %arg1[%c25] : memref<321xf32, #tpu.memory_space<smem>>
    %c26 = arith.constant 26 : index
    %26 = memref.load %arg1[%c26] : memref<321xf32, #tpu.memory_space<smem>>
    %c27 = arith.constant 27 : index
    %27 = memref.load %arg1[%c27] : memref<321xf32, #tpu.memory_space<smem>>
    %c28 = arith.constant 28 : index
    %28 = memref.load %arg1[%c28] : memref<321xf32, #tpu.memory_space<smem>>
    %c29 = arith.constant 29 : index
    %29 = memref.load %arg1[%c29] : memref<321xf32, #tpu.memory_space<smem>>
    %c30 = arith.constant 30 : index
    %30 = memref.load %arg1[%c30] : memref<321xf32, #tpu.memory_space<smem>>
    %c31 = arith.constant 31 : index
    %31 = memref.load %arg1[%c31] : memref<321xf32, #tpu.memory_space<smem>>
    %c32 = arith.constant 32 : index
    %32 = memref.load %arg1[%c32] : memref<321xf32, #tpu.memory_space<smem>>
    %c33 = arith.constant 33 : index
    %33 = memref.load %arg1[%c33] : memref<321xf32, #tpu.memory_space<smem>>
    %c34 = arith.constant 34 : index
    %34 = memref.load %arg1[%c34] : memref<321xf32, #tpu.memory_space<smem>>
    %c35 = arith.constant 35 : index
    %35 = memref.load %arg1[%c35] : memref<321xf32, #tpu.memory_space<smem>>
    %c36 = arith.constant 36 : index
    %36 = memref.load %arg1[%c36] : memref<321xf32, #tpu.memory_space<smem>>
    %c37 = arith.constant 37 : index
    %37 = memref.load %arg1[%c37] : memref<321xf32, #tpu.memory_space<smem>>
    %c38 = arith.constant 38 : index
    %38 = memref.load %arg1[%c38] : memref<321xf32, #tpu.memory_space<smem>>
    %c39 = arith.constant 39 : index
    %39 = memref.load %arg1[%c39] : memref<321xf32, #tpu.memory_space<smem>>
    %c40 = arith.constant 40 : index
    %40 = memref.load %arg1[%c40] : memref<321xf32, #tpu.memory_space<smem>>
    %c41 = arith.constant 41 : index
    %41 = memref.load %arg1[%c41] : memref<321xf32, #tpu.memory_space<smem>>
    %c42 = arith.constant 42 : index
    %42 = memref.load %arg1[%c42] : memref<321xf32, #tpu.memory_space<smem>>
    %c43 = arith.constant 43 : index
    %43 = memref.load %arg1[%c43] : memref<321xf32, #tpu.memory_space<smem>>
    %c44 = arith.constant 44 : index
    %44 = memref.load %arg1[%c44] : memref<321xf32, #tpu.memory_space<smem>>
    %c45 = arith.constant 45 : index
    %45 = memref.load %arg1[%c45] : memref<321xf32, #tpu.memory_space<smem>>
    %c46 = arith.constant 46 : index
    %46 = memref.load %arg1[%c46] : memref<321xf32, #tpu.memory_space<smem>>
    %c47 = arith.constant 47 : index
    %47 = memref.load %arg1[%c47] : memref<321xf32, #tpu.memory_space<smem>>
    %c48 = arith.constant 48 : index
    %48 = memref.load %arg1[%c48] : memref<321xf32, #tpu.memory_space<smem>>
    %c49 = arith.constant 49 : index
    %49 = memref.load %arg1[%c49] : memref<321xf32, #tpu.memory_space<smem>>
    %c50 = arith.constant 50 : index
    %50 = memref.load %arg1[%c50] : memref<321xf32, #tpu.memory_space<smem>>
    %c51 = arith.constant 51 : index
    %51 = memref.load %arg1[%c51] : memref<321xf32, #tpu.memory_space<smem>>
    %c52 = arith.constant 52 : index
    %52 = memref.load %arg1[%c52] : memref<321xf32, #tpu.memory_space<smem>>
    %c53 = arith.constant 53 : index
    %53 = memref.load %arg1[%c53] : memref<321xf32, #tpu.memory_space<smem>>
    %c54 = arith.constant 54 : index
    %54 = memref.load %arg1[%c54] : memref<321xf32, #tpu.memory_space<smem>>
    %c55 = arith.constant 55 : index
    %55 = memref.load %arg1[%c55] : memref<321xf32, #tpu.memory_space<smem>>
    %c56 = arith.constant 56 : index
    %56 = memref.load %arg1[%c56] : memref<321xf32, #tpu.memory_space<smem>>
    %c57 = arith.constant 57 : index
    %57 = memref.load %arg1[%c57] : memref<321xf32, #tpu.memory_space<smem>>
    %c58 = arith.constant 58 : index
    %58 = memref.load %arg1[%c58] : memref<321xf32, #tpu.memory_space<smem>>
    %c59 = arith.constant 59 : index
    %59 = memref.load %arg1[%c59] : memref<321xf32, #tpu.memory_space<smem>>
    %c60 = arith.constant 60 : index
    %60 = memref.load %arg1[%c60] : memref<321xf32, #tpu.memory_space<smem>>
    %c61 = arith.constant 61 : index
    %61 = memref.load %arg1[%c61] : memref<321xf32, #tpu.memory_space<smem>>
    %c62 = arith.constant 62 : index
    %62 = memref.load %arg1[%c62] : memref<321xf32, #tpu.memory_space<smem>>
    %c63 = arith.constant 63 : index
    %63 = memref.load %arg1[%c63] : memref<321xf32, #tpu.memory_space<smem>>
    %c64 = arith.constant 64 : index
    %64 = memref.load %arg1[%c64] : memref<321xf32, #tpu.memory_space<smem>>
    %c65 = arith.constant 65 : index
    %65 = memref.load %arg1[%c65] : memref<321xf32, #tpu.memory_space<smem>>
    %c66 = arith.constant 66 : index
    %66 = memref.load %arg1[%c66] : memref<321xf32, #tpu.memory_space<smem>>
    %c67 = arith.constant 67 : index
    %67 = memref.load %arg1[%c67] : memref<321xf32, #tpu.memory_space<smem>>
    %c68 = arith.constant 68 : index
    %68 = memref.load %arg1[%c68] : memref<321xf32, #tpu.memory_space<smem>>
    %c69 = arith.constant 69 : index
    %69 = memref.load %arg1[%c69] : memref<321xf32, #tpu.memory_space<smem>>
    %c70 = arith.constant 70 : index
    %70 = memref.load %arg1[%c70] : memref<321xf32, #tpu.memory_space<smem>>
    %c71 = arith.constant 71 : index
    %71 = memref.load %arg1[%c71] : memref<321xf32, #tpu.memory_space<smem>>
    %c72 = arith.constant 72 : index
    %72 = memref.load %arg1[%c72] : memref<321xf32, #tpu.memory_space<smem>>
    %c73 = arith.constant 73 : index
    %73 = memref.load %arg1[%c73] : memref<321xf32, #tpu.memory_space<smem>>
    %c74 = arith.constant 74 : index
    %74 = memref.load %arg1[%c74] : memref<321xf32, #tpu.memory_space<smem>>
    %c75 = arith.constant 75 : index
    %75 = memref.load %arg1[%c75] : memref<321xf32, #tpu.memory_space<smem>>
    %c76 = arith.constant 76 : index
    %76 = memref.load %arg1[%c76] : memref<321xf32, #tpu.memory_space<smem>>
    %c77 = arith.constant 77 : index
    %77 = memref.load %arg1[%c77] : memref<321xf32, #tpu.memory_space<smem>>
    %c78 = arith.constant 78 : index
    %78 = memref.load %arg1[%c78] : memref<321xf32, #tpu.memory_space<smem>>
    %c79 = arith.constant 79 : index
    %79 = memref.load %arg1[%c79] : memref<321xf32, #tpu.memory_space<smem>>
    %c80 = arith.constant 80 : index
    %80 = memref.load %arg1[%c80] : memref<321xf32, #tpu.memory_space<smem>>
    %c81 = arith.constant 81 : index
    %81 = memref.load %arg1[%c81] : memref<321xf32, #tpu.memory_space<smem>>
    %c82 = arith.constant 82 : index
    %82 = memref.load %arg1[%c82] : memref<321xf32, #tpu.memory_space<smem>>
    %c83 = arith.constant 83 : index
    %83 = memref.load %arg1[%c83] : memref<321xf32, #tpu.memory_space<smem>>
    %c84 = arith.constant 84 : index
    %84 = memref.load %arg1[%c84] : memref<321xf32, #tpu.memory_space<smem>>
    %c85 = arith.constant 85 : index
    %85 = memref.load %arg1[%c85] : memref<321xf32, #tpu.memory_space<smem>>
    %c86 = arith.constant 86 : index
    %86 = memref.load %arg1[%c86] : memref<321xf32, #tpu.memory_space<smem>>
    %c87 = arith.constant 87 : index
    %87 = memref.load %arg1[%c87] : memref<321xf32, #tpu.memory_space<smem>>
    %c88 = arith.constant 88 : index
    %88 = memref.load %arg1[%c88] : memref<321xf32, #tpu.memory_space<smem>>
    %c89 = arith.constant 89 : index
    %89 = memref.load %arg1[%c89] : memref<321xf32, #tpu.memory_space<smem>>
    %c90 = arith.constant 90 : index
    %90 = memref.load %arg1[%c90] : memref<321xf32, #tpu.memory_space<smem>>
    %c91 = arith.constant 91 : index
    %91 = memref.load %arg1[%c91] : memref<321xf32, #tpu.memory_space<smem>>
    %c92 = arith.constant 92 : index
    %92 = memref.load %arg1[%c92] : memref<321xf32, #tpu.memory_space<smem>>
    %c93 = arith.constant 93 : index
    %93 = memref.load %arg1[%c93] : memref<321xf32, #tpu.memory_space<smem>>
    %c94 = arith.constant 94 : index
    %94 = memref.load %arg1[%c94] : memref<321xf32, #tpu.memory_space<smem>>
    %c95 = arith.constant 95 : index
    %95 = memref.load %arg1[%c95] : memref<321xf32, #tpu.memory_space<smem>>
    %c96 = arith.constant 96 : index
    %96 = memref.load %arg1[%c96] : memref<321xf32, #tpu.memory_space<smem>>
    %c97 = arith.constant 97 : index
    %97 = memref.load %arg1[%c97] : memref<321xf32, #tpu.memory_space<smem>>
    %c98 = arith.constant 98 : index
    %98 = memref.load %arg1[%c98] : memref<321xf32, #tpu.memory_space<smem>>
    %c99 = arith.constant 99 : index
    %99 = memref.load %arg1[%c99] : memref<321xf32, #tpu.memory_space<smem>>
    %c100 = arith.constant 100 : index
    %100 = memref.load %arg1[%c100] : memref<321xf32, #tpu.memory_space<smem>>
    %c101 = arith.constant 101 : index
    %101 = memref.load %arg1[%c101] : memref<321xf32, #tpu.memory_space<smem>>
    %c102 = arith.constant 102 : index
    %102 = memref.load %arg1[%c102] : memref<321xf32, #tpu.memory_space<smem>>
    %c103 = arith.constant 103 : index
    %103 = memref.load %arg1[%c103] : memref<321xf32, #tpu.memory_space<smem>>
    %c104 = arith.constant 104 : index
    %104 = memref.load %arg1[%c104] : memref<321xf32, #tpu.memory_space<smem>>
    %c105 = arith.constant 105 : index
    %105 = memref.load %arg1[%c105] : memref<321xf32, #tpu.memory_space<smem>>
    %c106 = arith.constant 106 : index
    %106 = memref.load %arg1[%c106] : memref<321xf32, #tpu.memory_space<smem>>
    %c107 = arith.constant 107 : index
    %107 = memref.load %arg1[%c107] : memref<321xf32, #tpu.memory_space<smem>>
    %c108 = arith.constant 108 : index
    %108 = memref.load %arg1[%c108] : memref<321xf32, #tpu.memory_space<smem>>
    %c109 = arith.constant 109 : index
    %109 = memref.load %arg1[%c109] : memref<321xf32, #tpu.memory_space<smem>>
    %c110 = arith.constant 110 : index
    %110 = memref.load %arg1[%c110] : memref<321xf32, #tpu.memory_space<smem>>
    %c111 = arith.constant 111 : index
    %111 = memref.load %arg1[%c111] : memref<321xf32, #tpu.memory_space<smem>>
    %c112 = arith.constant 112 : index
    %112 = memref.load %arg1[%c112] : memref<321xf32, #tpu.memory_space<smem>>
    %c113 = arith.constant 113 : index
    %113 = memref.load %arg1[%c113] : memref<321xf32, #tpu.memory_space<smem>>
    %c114 = arith.constant 114 : index
    %114 = memref.load %arg1[%c114] : memref<321xf32, #tpu.memory_space<smem>>
    %c115 = arith.constant 115 : index
    %115 = memref.load %arg1[%c115] : memref<321xf32, #tpu.memory_space<smem>>
    %c116 = arith.constant 116 : index
    %116 = memref.load %arg1[%c116] : memref<321xf32, #tpu.memory_space<smem>>
    %c117 = arith.constant 117 : index
    %117 = memref.load %arg1[%c117] : memref<321xf32, #tpu.memory_space<smem>>
    %c118 = arith.constant 118 : index
    %118 = memref.load %arg1[%c118] : memref<321xf32, #tpu.memory_space<smem>>
    %c119 = arith.constant 119 : index
    %119 = memref.load %arg1[%c119] : memref<321xf32, #tpu.memory_space<smem>>
    %c120 = arith.constant 120 : index
    %120 = memref.load %arg1[%c120] : memref<321xf32, #tpu.memory_space<smem>>
    %c121 = arith.constant 121 : index
    %121 = memref.load %arg1[%c121] : memref<321xf32, #tpu.memory_space<smem>>
    %c122 = arith.constant 122 : index
    %122 = memref.load %arg1[%c122] : memref<321xf32, #tpu.memory_space<smem>>
    %c123 = arith.constant 123 : index
    %123 = memref.load %arg1[%c123] : memref<321xf32, #tpu.memory_space<smem>>
    %c124 = arith.constant 124 : index
    %124 = memref.load %arg1[%c124] : memref<321xf32, #tpu.memory_space<smem>>
    %c125 = arith.constant 125 : index
    %125 = memref.load %arg1[%c125] : memref<321xf32, #tpu.memory_space<smem>>
    %c126 = arith.constant 126 : index
    %126 = memref.load %arg1[%c126] : memref<321xf32, #tpu.memory_space<smem>>
    %c127 = arith.constant 127 : index
    %127 = memref.load %arg1[%c127] : memref<321xf32, #tpu.memory_space<smem>>
    %c128 = arith.constant 128 : index
    %128 = memref.load %arg1[%c128] : memref<321xf32, #tpu.memory_space<smem>>
    %c129 = arith.constant 129 : index
    %129 = memref.load %arg1[%c129] : memref<321xf32, #tpu.memory_space<smem>>
    %c130 = arith.constant 130 : index
    %130 = memref.load %arg1[%c130] : memref<321xf32, #tpu.memory_space<smem>>
    %c131 = arith.constant 131 : index
    %131 = memref.load %arg1[%c131] : memref<321xf32, #tpu.memory_space<smem>>
    %c132 = arith.constant 132 : index
    %132 = memref.load %arg1[%c132] : memref<321xf32, #tpu.memory_space<smem>>
    %c133 = arith.constant 133 : index
    %133 = memref.load %arg1[%c133] : memref<321xf32, #tpu.memory_space<smem>>
    %c134 = arith.constant 134 : index
    %134 = memref.load %arg1[%c134] : memref<321xf32, #tpu.memory_space<smem>>
    %c135 = arith.constant 135 : index
    %135 = memref.load %arg1[%c135] : memref<321xf32, #tpu.memory_space<smem>>
    %c136 = arith.constant 136 : index
    %136 = memref.load %arg1[%c136] : memref<321xf32, #tpu.memory_space<smem>>
    %c137 = arith.constant 137 : index
    %137 = memref.load %arg1[%c137] : memref<321xf32, #tpu.memory_space<smem>>
    %c138 = arith.constant 138 : index
    %138 = memref.load %arg1[%c138] : memref<321xf32, #tpu.memory_space<smem>>
    %c139 = arith.constant 139 : index
    %139 = memref.load %arg1[%c139] : memref<321xf32, #tpu.memory_space<smem>>
    %c140 = arith.constant 140 : index
    %140 = memref.load %arg1[%c140] : memref<321xf32, #tpu.memory_space<smem>>
    %c141 = arith.constant 141 : index
    %141 = memref.load %arg1[%c141] : memref<321xf32, #tpu.memory_space<smem>>
    %c142 = arith.constant 142 : index
    %142 = memref.load %arg1[%c142] : memref<321xf32, #tpu.memory_space<smem>>
    %c143 = arith.constant 143 : index
    %143 = memref.load %arg1[%c143] : memref<321xf32, #tpu.memory_space<smem>>
    %c144 = arith.constant 144 : index
    %144 = memref.load %arg1[%c144] : memref<321xf32, #tpu.memory_space<smem>>
    %c145 = arith.constant 145 : index
    %145 = memref.load %arg1[%c145] : memref<321xf32, #tpu.memory_space<smem>>
    %c146 = arith.constant 146 : index
    %146 = memref.load %arg1[%c146] : memref<321xf32, #tpu.memory_space<smem>>
    %c147 = arith.constant 147 : index
    %147 = memref.load %arg1[%c147] : memref<321xf32, #tpu.memory_space<smem>>
    %c148 = arith.constant 148 : index
    %148 = memref.load %arg1[%c148] : memref<321xf32, #tpu.memory_space<smem>>
    %c149 = arith.constant 149 : index
    %149 = memref.load %arg1[%c149] : memref<321xf32, #tpu.memory_space<smem>>
    %c150 = arith.constant 150 : index
    %150 = memref.load %arg1[%c150] : memref<321xf32, #tpu.memory_space<smem>>
    %c151 = arith.constant 151 : index
    %151 = memref.load %arg1[%c151] : memref<321xf32, #tpu.memory_space<smem>>
    %c152 = arith.constant 152 : index
    %152 = memref.load %arg1[%c152] : memref<321xf32, #tpu.memory_space<smem>>
    %c153 = arith.constant 153 : index
    %153 = memref.load %arg1[%c153] : memref<321xf32, #tpu.memory_space<smem>>
    %c154 = arith.constant 154 : index
    %154 = memref.load %arg1[%c154] : memref<321xf32, #tpu.memory_space<smem>>
    %c155 = arith.constant 155 : index
    %155 = memref.load %arg1[%c155] : memref<321xf32, #tpu.memory_space<smem>>
    %c156 = arith.constant 156 : index
    %156 = memref.load %arg1[%c156] : memref<321xf32, #tpu.memory_space<smem>>
    %c157 = arith.constant 157 : index
    %157 = memref.load %arg1[%c157] : memref<321xf32, #tpu.memory_space<smem>>
    %c158 = arith.constant 158 : index
    %158 = memref.load %arg1[%c158] : memref<321xf32, #tpu.memory_space<smem>>
    %c159 = arith.constant 159 : index
    %159 = memref.load %arg1[%c159] : memref<321xf32, #tpu.memory_space<smem>>
    %c160 = arith.constant 160 : index
    %160 = memref.load %arg1[%c160] : memref<321xf32, #tpu.memory_space<smem>>
    %c161 = arith.constant 161 : index
    %161 = memref.load %arg1[%c161] : memref<321xf32, #tpu.memory_space<smem>>
    %c162 = arith.constant 162 : index
    %162 = memref.load %arg1[%c162] : memref<321xf32, #tpu.memory_space<smem>>
    %c163 = arith.constant 163 : index
    %163 = memref.load %arg1[%c163] : memref<321xf32, #tpu.memory_space<smem>>
    %c164 = arith.constant 164 : index
    %164 = memref.load %arg1[%c164] : memref<321xf32, #tpu.memory_space<smem>>
    %c165 = arith.constant 165 : index
    %165 = memref.load %arg1[%c165] : memref<321xf32, #tpu.memory_space<smem>>
    %c166 = arith.constant 166 : index
    %166 = memref.load %arg1[%c166] : memref<321xf32, #tpu.memory_space<smem>>
    %c167 = arith.constant 167 : index
    %167 = memref.load %arg1[%c167] : memref<321xf32, #tpu.memory_space<smem>>
    %c168 = arith.constant 168 : index
    %168 = memref.load %arg1[%c168] : memref<321xf32, #tpu.memory_space<smem>>
    %c169 = arith.constant 169 : index
    %169 = memref.load %arg1[%c169] : memref<321xf32, #tpu.memory_space<smem>>
    %c170 = arith.constant 170 : index
    %170 = memref.load %arg1[%c170] : memref<321xf32, #tpu.memory_space<smem>>
    %c171 = arith.constant 171 : index
    %171 = memref.load %arg1[%c171] : memref<321xf32, #tpu.memory_space<smem>>
    %c172 = arith.constant 172 : index
    %172 = memref.load %arg1[%c172] : memref<321xf32, #tpu.memory_space<smem>>
    %c173 = arith.constant 173 : index
    %173 = memref.load %arg1[%c173] : memref<321xf32, #tpu.memory_space<smem>>
    %c174 = arith.constant 174 : index
    %174 = memref.load %arg1[%c174] : memref<321xf32, #tpu.memory_space<smem>>
    %c175 = arith.constant 175 : index
    %175 = memref.load %arg1[%c175] : memref<321xf32, #tpu.memory_space<smem>>
    %c176 = arith.constant 176 : index
    %176 = memref.load %arg1[%c176] : memref<321xf32, #tpu.memory_space<smem>>
    %c177 = arith.constant 177 : index
    %177 = memref.load %arg1[%c177] : memref<321xf32, #tpu.memory_space<smem>>
    %c178 = arith.constant 178 : index
    %178 = memref.load %arg1[%c178] : memref<321xf32, #tpu.memory_space<smem>>
    %c179 = arith.constant 179 : index
    %179 = memref.load %arg1[%c179] : memref<321xf32, #tpu.memory_space<smem>>
    %c180 = arith.constant 180 : index
    %180 = memref.load %arg1[%c180] : memref<321xf32, #tpu.memory_space<smem>>
    %c181 = arith.constant 181 : index
    %181 = memref.load %arg1[%c181] : memref<321xf32, #tpu.memory_space<smem>>
    %c182 = arith.constant 182 : index
    %182 = memref.load %arg1[%c182] : memref<321xf32, #tpu.memory_space<smem>>
    %c183 = arith.constant 183 : index
    %183 = memref.load %arg1[%c183] : memref<321xf32, #tpu.memory_space<smem>>
    %c184 = arith.constant 184 : index
    %184 = memref.load %arg1[%c184] : memref<321xf32, #tpu.memory_space<smem>>
    %c185 = arith.constant 185 : index
    %185 = memref.load %arg1[%c185] : memref<321xf32, #tpu.memory_space<smem>>
    %c186 = arith.constant 186 : index
    %186 = memref.load %arg1[%c186] : memref<321xf32, #tpu.memory_space<smem>>
    %c187 = arith.constant 187 : index
    %187 = memref.load %arg1[%c187] : memref<321xf32, #tpu.memory_space<smem>>
    %c188 = arith.constant 188 : index
    %188 = memref.load %arg1[%c188] : memref<321xf32, #tpu.memory_space<smem>>
    %c189 = arith.constant 189 : index
    %189 = memref.load %arg1[%c189] : memref<321xf32, #tpu.memory_space<smem>>
    %c190 = arith.constant 190 : index
    %190 = memref.load %arg1[%c190] : memref<321xf32, #tpu.memory_space<smem>>
    %c191 = arith.constant 191 : index
    %191 = memref.load %arg1[%c191] : memref<321xf32, #tpu.memory_space<smem>>
    %c192 = arith.constant 192 : index
    %192 = memref.load %arg1[%c192] : memref<321xf32, #tpu.memory_space<smem>>
    %c193 = arith.constant 193 : index
    %193 = memref.load %arg1[%c193] : memref<321xf32, #tpu.memory_space<smem>>
    %c194 = arith.constant 194 : index
    %194 = memref.load %arg1[%c194] : memref<321xf32, #tpu.memory_space<smem>>
    %c195 = arith.constant 195 : index
    %195 = memref.load %arg1[%c195] : memref<321xf32, #tpu.memory_space<smem>>
    %c196 = arith.constant 196 : index
    %196 = memref.load %arg1[%c196] : memref<321xf32, #tpu.memory_space<smem>>
    %c197 = arith.constant 197 : index
    %197 = memref.load %arg1[%c197] : memref<321xf32, #tpu.memory_space<smem>>
    %c198 = arith.constant 198 : index
    %198 = memref.load %arg1[%c198] : memref<321xf32, #tpu.memory_space<smem>>
    %c199 = arith.constant 199 : index
    %199 = memref.load %arg1[%c199] : memref<321xf32, #tpu.memory_space<smem>>
    %c200 = arith.constant 200 : index
    %200 = memref.load %arg1[%c200] : memref<321xf32, #tpu.memory_space<smem>>
    %c201 = arith.constant 201 : index
    %201 = memref.load %arg1[%c201] : memref<321xf32, #tpu.memory_space<smem>>
    %c202 = arith.constant 202 : index
    %202 = memref.load %arg1[%c202] : memref<321xf32, #tpu.memory_space<smem>>
    %c203 = arith.constant 203 : index
    %203 = memref.load %arg1[%c203] : memref<321xf32, #tpu.memory_space<smem>>
    %c204 = arith.constant 204 : index
    %204 = memref.load %arg1[%c204] : memref<321xf32, #tpu.memory_space<smem>>
    %c205 = arith.constant 205 : index
    %205 = memref.load %arg1[%c205] : memref<321xf32, #tpu.memory_space<smem>>
    %c206 = arith.constant 206 : index
    %206 = memref.load %arg1[%c206] : memref<321xf32, #tpu.memory_space<smem>>
    %c207 = arith.constant 207 : index
    %207 = memref.load %arg1[%c207] : memref<321xf32, #tpu.memory_space<smem>>
    %c208 = arith.constant 208 : index
    %208 = memref.load %arg1[%c208] : memref<321xf32, #tpu.memory_space<smem>>
    %c209 = arith.constant 209 : index
    %209 = memref.load %arg1[%c209] : memref<321xf32, #tpu.memory_space<smem>>
    %c210 = arith.constant 210 : index
    %210 = memref.load %arg1[%c210] : memref<321xf32, #tpu.memory_space<smem>>
    %c211 = arith.constant 211 : index
    %211 = memref.load %arg1[%c211] : memref<321xf32, #tpu.memory_space<smem>>
    %c212 = arith.constant 212 : index
    %212 = memref.load %arg1[%c212] : memref<321xf32, #tpu.memory_space<smem>>
    %c213 = arith.constant 213 : index
    %213 = memref.load %arg1[%c213] : memref<321xf32, #tpu.memory_space<smem>>
    %c214 = arith.constant 214 : index
    %214 = memref.load %arg1[%c214] : memref<321xf32, #tpu.memory_space<smem>>
    %c215 = arith.constant 215 : index
    %215 = memref.load %arg1[%c215] : memref<321xf32, #tpu.memory_space<smem>>
    %c216 = arith.constant 216 : index
    %216 = memref.load %arg1[%c216] : memref<321xf32, #tpu.memory_space<smem>>
    %c217 = arith.constant 217 : index
    %217 = memref.load %arg1[%c217] : memref<321xf32, #tpu.memory_space<smem>>
    %c218 = arith.constant 218 : index
    %218 = memref.load %arg1[%c218] : memref<321xf32, #tpu.memory_space<smem>>
    %c219 = arith.constant 219 : index
    %219 = memref.load %arg1[%c219] : memref<321xf32, #tpu.memory_space<smem>>
    %c220 = arith.constant 220 : index
    %220 = memref.load %arg1[%c220] : memref<321xf32, #tpu.memory_space<smem>>
    %c221 = arith.constant 221 : index
    %221 = memref.load %arg1[%c221] : memref<321xf32, #tpu.memory_space<smem>>
    %c222 = arith.constant 222 : index
    %222 = memref.load %arg1[%c222] : memref<321xf32, #tpu.memory_space<smem>>
    %c223 = arith.constant 223 : index
    %223 = memref.load %arg1[%c223] : memref<321xf32, #tpu.memory_space<smem>>
    %c224 = arith.constant 224 : index
    %224 = memref.load %arg1[%c224] : memref<321xf32, #tpu.memory_space<smem>>
    %c225 = arith.constant 225 : index
    %225 = memref.load %arg1[%c225] : memref<321xf32, #tpu.memory_space<smem>>
    %c226 = arith.constant 226 : index
    %226 = memref.load %arg1[%c226] : memref<321xf32, #tpu.memory_space<smem>>
    %c227 = arith.constant 227 : index
    %227 = memref.load %arg1[%c227] : memref<321xf32, #tpu.memory_space<smem>>
    %c228 = arith.constant 228 : index
    %228 = memref.load %arg1[%c228] : memref<321xf32, #tpu.memory_space<smem>>
    %c229 = arith.constant 229 : index
    %229 = memref.load %arg1[%c229] : memref<321xf32, #tpu.memory_space<smem>>
    %c230 = arith.constant 230 : index
    %230 = memref.load %arg1[%c230] : memref<321xf32, #tpu.memory_space<smem>>
    %c231 = arith.constant 231 : index
    %231 = memref.load %arg1[%c231] : memref<321xf32, #tpu.memory_space<smem>>
    %c232 = arith.constant 232 : index
    %232 = memref.load %arg1[%c232] : memref<321xf32, #tpu.memory_space<smem>>
    %c233 = arith.constant 233 : index
    %233 = memref.load %arg1[%c233] : memref<321xf32, #tpu.memory_space<smem>>
    %c234 = arith.constant 234 : index
    %234 = memref.load %arg1[%c234] : memref<321xf32, #tpu.memory_space<smem>>
    %c235 = arith.constant 235 : index
    %235 = memref.load %arg1[%c235] : memref<321xf32, #tpu.memory_space<smem>>
    %c236 = arith.constant 236 : index
    %236 = memref.load %arg1[%c236] : memref<321xf32, #tpu.memory_space<smem>>
    %c237 = arith.constant 237 : index
    %237 = memref.load %arg1[%c237] : memref<321xf32, #tpu.memory_space<smem>>
    %c238 = arith.constant 238 : index
    %238 = memref.load %arg1[%c238] : memref<321xf32, #tpu.memory_space<smem>>
    %c239 = arith.constant 239 : index
    %239 = memref.load %arg1[%c239] : memref<321xf32, #tpu.memory_space<smem>>
    %c240 = arith.constant 240 : index
    %240 = memref.load %arg1[%c240] : memref<321xf32, #tpu.memory_space<smem>>
    %c241 = arith.constant 241 : index
    %241 = memref.load %arg1[%c241] : memref<321xf32, #tpu.memory_space<smem>>
    %c242 = arith.constant 242 : index
    %242 = memref.load %arg1[%c242] : memref<321xf32, #tpu.memory_space<smem>>
    %c243 = arith.constant 243 : index
    %243 = memref.load %arg1[%c243] : memref<321xf32, #tpu.memory_space<smem>>
    %c244 = arith.constant 244 : index
    %244 = memref.load %arg1[%c244] : memref<321xf32, #tpu.memory_space<smem>>
    %c245 = arith.constant 245 : index
    %245 = memref.load %arg1[%c245] : memref<321xf32, #tpu.memory_space<smem>>
    %c246 = arith.constant 246 : index
    %246 = memref.load %arg1[%c246] : memref<321xf32, #tpu.memory_space<smem>>
    %c247 = arith.constant 247 : index
    %247 = memref.load %arg1[%c247] : memref<321xf32, #tpu.memory_space<smem>>
    %c248 = arith.constant 248 : index
    %248 = memref.load %arg1[%c248] : memref<321xf32, #tpu.memory_space<smem>>
    %c249 = arith.constant 249 : index
    %249 = memref.load %arg1[%c249] : memref<321xf32, #tpu.memory_space<smem>>
    %c250 = arith.constant 250 : index
    %250 = memref.load %arg1[%c250] : memref<321xf32, #tpu.memory_space<smem>>
    %c251 = arith.constant 251 : index
    %251 = memref.load %arg1[%c251] : memref<321xf32, #tpu.memory_space<smem>>
    %c252 = arith.constant 252 : index
    %252 = memref.load %arg1[%c252] : memref<321xf32, #tpu.memory_space<smem>>
    %c253 = arith.constant 253 : index
    %253 = memref.load %arg1[%c253] : memref<321xf32, #tpu.memory_space<smem>>
    %c254 = arith.constant 254 : index
    %254 = memref.load %arg1[%c254] : memref<321xf32, #tpu.memory_space<smem>>
    %c255 = arith.constant 255 : index
    %255 = memref.load %arg1[%c255] : memref<321xf32, #tpu.memory_space<smem>>
    %c256 = arith.constant 256 : index
    %256 = memref.load %arg1[%c256] : memref<321xf32, #tpu.memory_space<smem>>
    %c257 = arith.constant 257 : index
    %257 = memref.load %arg1[%c257] : memref<321xf32, #tpu.memory_space<smem>>
    %c258 = arith.constant 258 : index
    %258 = memref.load %arg1[%c258] : memref<321xf32, #tpu.memory_space<smem>>
    %c259 = arith.constant 259 : index
    %259 = memref.load %arg1[%c259] : memref<321xf32, #tpu.memory_space<smem>>
    %c260 = arith.constant 260 : index
    %260 = memref.load %arg1[%c260] : memref<321xf32, #tpu.memory_space<smem>>
    %c261 = arith.constant 261 : index
    %261 = memref.load %arg1[%c261] : memref<321xf32, #tpu.memory_space<smem>>
    %c262 = arith.constant 262 : index
    %262 = memref.load %arg1[%c262] : memref<321xf32, #tpu.memory_space<smem>>
    %c263 = arith.constant 263 : index
    %263 = memref.load %arg1[%c263] : memref<321xf32, #tpu.memory_space<smem>>
    %c264 = arith.constant 264 : index
    %264 = memref.load %arg1[%c264] : memref<321xf32, #tpu.memory_space<smem>>
    %c265 = arith.constant 265 : index
    %265 = memref.load %arg1[%c265] : memref<321xf32, #tpu.memory_space<smem>>
    %c266 = arith.constant 266 : index
    %266 = memref.load %arg1[%c266] : memref<321xf32, #tpu.memory_space<smem>>
    %c267 = arith.constant 267 : index
    %267 = memref.load %arg1[%c267] : memref<321xf32, #tpu.memory_space<smem>>
    %c268 = arith.constant 268 : index
    %268 = memref.load %arg1[%c268] : memref<321xf32, #tpu.memory_space<smem>>
    %c269 = arith.constant 269 : index
    %269 = memref.load %arg1[%c269] : memref<321xf32, #tpu.memory_space<smem>>
    %c270 = arith.constant 270 : index
    %270 = memref.load %arg1[%c270] : memref<321xf32, #tpu.memory_space<smem>>
    %c271 = arith.constant 271 : index
    %271 = memref.load %arg1[%c271] : memref<321xf32, #tpu.memory_space<smem>>
    %c272 = arith.constant 272 : index
    %272 = memref.load %arg1[%c272] : memref<321xf32, #tpu.memory_space<smem>>
    %c273 = arith.constant 273 : index
    %273 = memref.load %arg1[%c273] : memref<321xf32, #tpu.memory_space<smem>>
    %c274 = arith.constant 274 : index
    %274 = memref.load %arg1[%c274] : memref<321xf32, #tpu.memory_space<smem>>
    %c275 = arith.constant 275 : index
    %275 = memref.load %arg1[%c275] : memref<321xf32, #tpu.memory_space<smem>>
    %c276 = arith.constant 276 : index
    %276 = memref.load %arg1[%c276] : memref<321xf32, #tpu.memory_space<smem>>
    %c277 = arith.constant 277 : index
    %277 = memref.load %arg1[%c277] : memref<321xf32, #tpu.memory_space<smem>>
    %c278 = arith.constant 278 : index
    %278 = memref.load %arg1[%c278] : memref<321xf32, #tpu.memory_space<smem>>
    %c279 = arith.constant 279 : index
    %279 = memref.load %arg1[%c279] : memref<321xf32, #tpu.memory_space<smem>>
    %c280 = arith.constant 280 : index
    %280 = memref.load %arg1[%c280] : memref<321xf32, #tpu.memory_space<smem>>
    %c281 = arith.constant 281 : index
    %281 = memref.load %arg1[%c281] : memref<321xf32, #tpu.memory_space<smem>>
    %c282 = arith.constant 282 : index
    %282 = memref.load %arg1[%c282] : memref<321xf32, #tpu.memory_space<smem>>
    %c283 = arith.constant 283 : index
    %283 = memref.load %arg1[%c283] : memref<321xf32, #tpu.memory_space<smem>>
    %c284 = arith.constant 284 : index
    %284 = memref.load %arg1[%c284] : memref<321xf32, #tpu.memory_space<smem>>
    %c285 = arith.constant 285 : index
    %285 = memref.load %arg1[%c285] : memref<321xf32, #tpu.memory_space<smem>>
    %c286 = arith.constant 286 : index
    %286 = memref.load %arg1[%c286] : memref<321xf32, #tpu.memory_space<smem>>
    %c287 = arith.constant 287 : index
    %287 = memref.load %arg1[%c287] : memref<321xf32, #tpu.memory_space<smem>>
    %c288 = arith.constant 288 : index
    %288 = memref.load %arg1[%c288] : memref<321xf32, #tpu.memory_space<smem>>
    %c289 = arith.constant 289 : index
    %289 = memref.load %arg1[%c289] : memref<321xf32, #tpu.memory_space<smem>>
    %c290 = arith.constant 290 : index
    %290 = memref.load %arg1[%c290] : memref<321xf32, #tpu.memory_space<smem>>
    %c291 = arith.constant 291 : index
    %291 = memref.load %arg1[%c291] : memref<321xf32, #tpu.memory_space<smem>>
    %c292 = arith.constant 292 : index
    %292 = memref.load %arg1[%c292] : memref<321xf32, #tpu.memory_space<smem>>
    %c293 = arith.constant 293 : index
    %293 = memref.load %arg1[%c293] : memref<321xf32, #tpu.memory_space<smem>>
    %c294 = arith.constant 294 : index
    %294 = memref.load %arg1[%c294] : memref<321xf32, #tpu.memory_space<smem>>
    %c295 = arith.constant 295 : index
    %295 = memref.load %arg1[%c295] : memref<321xf32, #tpu.memory_space<smem>>
    %c296 = arith.constant 296 : index
    %296 = memref.load %arg1[%c296] : memref<321xf32, #tpu.memory_space<smem>>
    %c297 = arith.constant 297 : index
    %297 = memref.load %arg1[%c297] : memref<321xf32, #tpu.memory_space<smem>>
    %c298 = arith.constant 298 : index
    %298 = memref.load %arg1[%c298] : memref<321xf32, #tpu.memory_space<smem>>
    %c299 = arith.constant 299 : index
    %299 = memref.load %arg1[%c299] : memref<321xf32, #tpu.memory_space<smem>>
    %c300 = arith.constant 300 : index
    %300 = memref.load %arg1[%c300] : memref<321xf32, #tpu.memory_space<smem>>
    %c301 = arith.constant 301 : index
    %301 = memref.load %arg1[%c301] : memref<321xf32, #tpu.memory_space<smem>>
    %c302 = arith.constant 302 : index
    %302 = memref.load %arg1[%c302] : memref<321xf32, #tpu.memory_space<smem>>
    %c303 = arith.constant 303 : index
    %303 = memref.load %arg1[%c303] : memref<321xf32, #tpu.memory_space<smem>>
    %c304 = arith.constant 304 : index
    %304 = memref.load %arg1[%c304] : memref<321xf32, #tpu.memory_space<smem>>
    %c305 = arith.constant 305 : index
    %305 = memref.load %arg1[%c305] : memref<321xf32, #tpu.memory_space<smem>>
    %c306 = arith.constant 306 : index
    %306 = memref.load %arg1[%c306] : memref<321xf32, #tpu.memory_space<smem>>
    %c307 = arith.constant 307 : index
    %307 = memref.load %arg1[%c307] : memref<321xf32, #tpu.memory_space<smem>>
    %c308 = arith.constant 308 : index
    %308 = memref.load %arg1[%c308] : memref<321xf32, #tpu.memory_space<smem>>
    %c309 = arith.constant 309 : index
    %309 = memref.load %arg1[%c309] : memref<321xf32, #tpu.memory_space<smem>>
    %c310 = arith.constant 310 : index
    %310 = memref.load %arg1[%c310] : memref<321xf32, #tpu.memory_space<smem>>
    %c311 = arith.constant 311 : index
    %311 = memref.load %arg1[%c311] : memref<321xf32, #tpu.memory_space<smem>>
    %c312 = arith.constant 312 : index
    %312 = memref.load %arg1[%c312] : memref<321xf32, #tpu.memory_space<smem>>
    %c313 = arith.constant 313 : index
    %313 = memref.load %arg1[%c313] : memref<321xf32, #tpu.memory_space<smem>>
    %c314 = arith.constant 314 : index
    %314 = memref.load %arg1[%c314] : memref<321xf32, #tpu.memory_space<smem>>
    %c315 = arith.constant 315 : index
    %315 = memref.load %arg1[%c315] : memref<321xf32, #tpu.memory_space<smem>>
    %c316 = arith.constant 316 : index
    %316 = memref.load %arg1[%c316] : memref<321xf32, #tpu.memory_space<smem>>
    %c317 = arith.constant 317 : index
    %317 = memref.load %arg1[%c317] : memref<321xf32, #tpu.memory_space<smem>>
    %c318 = arith.constant 318 : index
    %318 = memref.load %arg1[%c318] : memref<321xf32, #tpu.memory_space<smem>>
    %c319 = arith.constant 319 : index
    %319 = memref.load %arg1[%c319] : memref<321xf32, #tpu.memory_space<smem>>
    %c320 = arith.constant 320 : index
    %320 = memref.load %arg1[%c320] : memref<321xf32, #tpu.memory_space<smem>>
    %c0_i32 = arith.constant 0 : i32
    %c128_i32 = arith.constant 128 : i32
    %321 = arith.muli %c0_i32, %c128_i32 : i32
    %322 = tpu.assume_multiple %321, 128 : i32
    %c0_0 = arith.constant 0 : index
    %c0_1 = arith.constant 0 : index
    %323 = arith.index_cast %322 : i32 to index
    %324 = vector.load %arg2[%c0_0, %c0_1, %323] : memref<4x8x128xf32, #tpu.memory_space<vmem>>, vector<1x8x128xf32>
    %325 = vector.shape_cast %324 : vector<1x8x128xf32> to vector<8x128xf32>
    %c1_2 = arith.constant 1 : index
    %c0_3 = arith.constant 0 : index
    %326 = arith.index_cast %322 : i32 to index
    %327 = vector.load %arg2[%c1_2, %c0_3, %326] : memref<4x8x128xf32, #tpu.memory_space<vmem>>, vector<1x8x128xf32>
    %328 = vector.shape_cast %327 : vector<1x8x128xf32> to vector<8x128xf32>
    %c2_4 = arith.constant 2 : index
    %c0_5 = arith.constant 0 : index
    %329 = arith.index_cast %322 : i32 to index
    %330 = vector.load %arg2[%c2_4, %c0_5, %329] : memref<4x8x128xf32, #tpu.memory_space<vmem>>, vector<1x8x128xf32>
    %331 = vector.shape_cast %330 : vector<1x8x128xf32> to vector<8x128xf32>
    %c3_6 = arith.constant 3 : index
    %c0_7 = arith.constant 0 : index
    %332 = arith.index_cast %322 : i32 to index
    %333 = vector.load %arg2[%c3_6, %c0_7, %332] : memref<4x8x128xf32, #tpu.memory_space<vmem>>, vector<1x8x128xf32>
    %334 = vector.shape_cast %333 : vector<1x8x128xf32> to vector<8x128xf32>
    %335 = vector.broadcast %0 : f32 to vector<8x128xf32>
    %336 = arith.mulf %325, %335 : vector<8x128xf32>
    %337 = vector.broadcast %80 : f32 to vector<8x128xf32>
    %338 = arith.addf %336, %337 : vector<8x128xf32>
    %339 = vector.broadcast %1 : f32 to vector<8x128xf32>
    %340 = arith.mulf %328, %339 : vector<8x128xf32>
    %341 = arith.addf %338, %340 : vector<8x128xf32>
    %342 = vector.broadcast %2 : f32 to vector<8x128xf32>
    %343 = arith.mulf %331, %342 : vector<8x128xf32>
    %344 = arith.addf %341, %343 : vector<8x128xf32>
    %345 = vector.broadcast %3 : f32 to vector<8x128xf32>
    %346 = arith.mulf %334, %345 : vector<8x128xf32>
    %347 = arith.addf %344, %346 : vector<8x128xf32>
    %cst = arith.constant 0.000000e+00 : f32
    %348 = vector.broadcast %cst : f32 to vector<8x128xf32>
    %349 = arith.maximumf %347, %348 : vector<8x128xf32>
    %350 = vector.broadcast %4 : f32 to vector<8x128xf32>
    %351 = arith.mulf %325, %350 : vector<8x128xf32>
    %352 = vector.broadcast %81 : f32 to vector<8x128xf32>
    %353 = arith.addf %351, %352 : vector<8x128xf32>
    %354 = vector.broadcast %5 : f32 to vector<8x128xf32>
    %355 = arith.mulf %328, %354 : vector<8x128xf32>
    %356 = arith.addf %353, %355 : vector<8x128xf32>
    %357 = vector.broadcast %6 : f32 to vector<8x128xf32>
    %358 = arith.mulf %331, %357 : vector<8x128xf32>
    %359 = arith.addf %356, %358 : vector<8x128xf32>
    %360 = vector.broadcast %7 : f32 to vector<8x128xf32>
    %361 = arith.mulf %334, %360 : vector<8x128xf32>
    %362 = arith.addf %359, %361 : vector<8x128xf32>
    %cst_8 = arith.constant 0.000000e+00 : f32
    %363 = vector.broadcast %cst_8 : f32 to vector<8x128xf32>
    %364 = arith.maximumf %362, %363 : vector<8x128xf32>
    %365 = vector.broadcast %8 : f32 to vector<8x128xf32>
    %366 = arith.mulf %325, %365 : vector<8x128xf32>
    %367 = vector.broadcast %82 : f32 to vector<8x128xf32>
    %368 = arith.addf %366, %367 : vector<8x128xf32>
    %369 = vector.broadcast %9 : f32 to vector<8x128xf32>
    %370 = arith.mulf %328, %369 : vector<8x128xf32>
    %371 = arith.addf %368, %370 : vector<8x128xf32>
    %372 = vector.broadcast %10 : f32 to vector<8x128xf32>
    %373 = arith.mulf %331, %372 : vector<8x128xf32>
    %374 = arith.addf %371, %373 : vector<8x128xf32>
    %375 = vector.broadcast %11 : f32 to vector<8x128xf32>
    %376 = arith.mulf %334, %375 : vector<8x128xf32>
    %377 = arith.addf %374, %376 : vector<8x128xf32>
    %cst_9 = arith.constant 0.000000e+00 : f32
    %378 = vector.broadcast %cst_9 : f32 to vector<8x128xf32>
    %379 = arith.maximumf %377, %378 : vector<8x128xf32>
    %380 = vector.broadcast %12 : f32 to vector<8x128xf32>
    %381 = arith.mulf %325, %380 : vector<8x128xf32>
    %382 = vector.broadcast %83 : f32 to vector<8x128xf32>
    %383 = arith.addf %381, %382 : vector<8x128xf32>
    %384 = vector.broadcast %13 : f32 to vector<8x128xf32>
    %385 = arith.mulf %328, %384 : vector<8x128xf32>
    %386 = arith.addf %383, %385 : vector<8x128xf32>
    %387 = vector.broadcast %14 : f32 to vector<8x128xf32>
    %388 = arith.mulf %331, %387 : vector<8x128xf32>
    %389 = arith.addf %386, %388 : vector<8x128xf32>
    %390 = vector.broadcast %15 : f32 to vector<8x128xf32>
    %391 = arith.mulf %334, %390 : vector<8x128xf32>
    %392 = arith.addf %389, %391 : vector<8x128xf32>
    %cst_10 = arith.constant 0.000000e+00 : f32
    %393 = vector.broadcast %cst_10 : f32 to vector<8x128xf32>
    %394 = arith.maximumf %392, %393 : vector<8x128xf32>
    %395 = vector.broadcast %16 : f32 to vector<8x128xf32>
    %396 = arith.mulf %325, %395 : vector<8x128xf32>
    %397 = vector.broadcast %84 : f32 to vector<8x128xf32>
    %398 = arith.addf %396, %397 : vector<8x128xf32>
    %399 = vector.broadcast %17 : f32 to vector<8x128xf32>
    %400 = arith.mulf %328, %399 : vector<8x128xf32>
    %401 = arith.addf %398, %400 : vector<8x128xf32>
    %402 = vector.broadcast %18 : f32 to vector<8x128xf32>
    %403 = arith.mulf %331, %402 : vector<8x128xf32>
    %404 = arith.addf %401, %403 : vector<8x128xf32>
    %405 = vector.broadcast %19 : f32 to vector<8x128xf32>
    %406 = arith.mulf %334, %405 : vector<8x128xf32>
    %407 = arith.addf %404, %406 : vector<8x128xf32>
    %cst_11 = arith.constant 0.000000e+00 : f32
    %408 = vector.broadcast %cst_11 : f32 to vector<8x128xf32>
    %409 = arith.maximumf %407, %408 : vector<8x128xf32>
    %410 = vector.broadcast %20 : f32 to vector<8x128xf32>
    %411 = arith.mulf %325, %410 : vector<8x128xf32>
    %412 = vector.broadcast %85 : f32 to vector<8x128xf32>
    %413 = arith.addf %411, %412 : vector<8x128xf32>
    %414 = vector.broadcast %21 : f32 to vector<8x128xf32>
    %415 = arith.mulf %328, %414 : vector<8x128xf32>
    %416 = arith.addf %413, %415 : vector<8x128xf32>
    %417 = vector.broadcast %22 : f32 to vector<8x128xf32>
    %418 = arith.mulf %331, %417 : vector<8x128xf32>
    %419 = arith.addf %416, %418 : vector<8x128xf32>
    %420 = vector.broadcast %23 : f32 to vector<8x128xf32>
    %421 = arith.mulf %334, %420 : vector<8x128xf32>
    %422 = arith.addf %419, %421 : vector<8x128xf32>
    %cst_12 = arith.constant 0.000000e+00 : f32
    %423 = vector.broadcast %cst_12 : f32 to vector<8x128xf32>
    %424 = arith.maximumf %422, %423 : vector<8x128xf32>
    %425 = vector.broadcast %24 : f32 to vector<8x128xf32>
    %426 = arith.mulf %325, %425 : vector<8x128xf32>
    %427 = vector.broadcast %86 : f32 to vector<8x128xf32>
    %428 = arith.addf %426, %427 : vector<8x128xf32>
    %429 = vector.broadcast %25 : f32 to vector<8x128xf32>
    %430 = arith.mulf %328, %429 : vector<8x128xf32>
    %431 = arith.addf %428, %430 : vector<8x128xf32>
    %432 = vector.broadcast %26 : f32 to vector<8x128xf32>
    %433 = arith.mulf %331, %432 : vector<8x128xf32>
    %434 = arith.addf %431, %433 : vector<8x128xf32>
    %435 = vector.broadcast %27 : f32 to vector<8x128xf32>
    %436 = arith.mulf %334, %435 : vector<8x128xf32>
    %437 = arith.addf %434, %436 : vector<8x128xf32>
    %cst_13 = arith.constant 0.000000e+00 : f32
    %438 = vector.broadcast %cst_13 : f32 to vector<8x128xf32>
    %439 = arith.maximumf %437, %438 : vector<8x128xf32>
    %440 = vector.broadcast %28 : f32 to vector<8x128xf32>
    %441 = arith.mulf %325, %440 : vector<8x128xf32>
    %442 = vector.broadcast %87 : f32 to vector<8x128xf32>
    %443 = arith.addf %441, %442 : vector<8x128xf32>
    %444 = vector.broadcast %29 : f32 to vector<8x128xf32>
    %445 = arith.mulf %328, %444 : vector<8x128xf32>
    %446 = arith.addf %443, %445 : vector<8x128xf32>
    %447 = vector.broadcast %30 : f32 to vector<8x128xf32>
    %448 = arith.mulf %331, %447 : vector<8x128xf32>
    %449 = arith.addf %446, %448 : vector<8x128xf32>
    %450 = vector.broadcast %31 : f32 to vector<8x128xf32>
    %451 = arith.mulf %334, %450 : vector<8x128xf32>
    %452 = arith.addf %449, %451 : vector<8x128xf32>
    %cst_14 = arith.constant 0.000000e+00 : f32
    %453 = vector.broadcast %cst_14 : f32 to vector<8x128xf32>
    %454 = arith.maximumf %452, %453 : vector<8x128xf32>
    %455 = vector.broadcast %32 : f32 to vector<8x128xf32>
    %456 = arith.mulf %325, %455 : vector<8x128xf32>
    %457 = vector.broadcast %88 : f32 to vector<8x128xf32>
    %458 = arith.addf %456, %457 : vector<8x128xf32>
    %459 = vector.broadcast %33 : f32 to vector<8x128xf32>
    %460 = arith.mulf %328, %459 : vector<8x128xf32>
    %461 = arith.addf %458, %460 : vector<8x128xf32>
    %462 = vector.broadcast %34 : f32 to vector<8x128xf32>
    %463 = arith.mulf %331, %462 : vector<8x128xf32>
    %464 = arith.addf %461, %463 : vector<8x128xf32>
    %465 = vector.broadcast %35 : f32 to vector<8x128xf32>
    %466 = arith.mulf %334, %465 : vector<8x128xf32>
    %467 = arith.addf %464, %466 : vector<8x128xf32>
    %cst_15 = arith.constant 0.000000e+00 : f32
    %468 = vector.broadcast %cst_15 : f32 to vector<8x128xf32>
    %469 = arith.maximumf %467, %468 : vector<8x128xf32>
    %470 = vector.broadcast %36 : f32 to vector<8x128xf32>
    %471 = arith.mulf %325, %470 : vector<8x128xf32>
    %472 = vector.broadcast %89 : f32 to vector<8x128xf32>
    %473 = arith.addf %471, %472 : vector<8x128xf32>
    %474 = vector.broadcast %37 : f32 to vector<8x128xf32>
    %475 = arith.mulf %328, %474 : vector<8x128xf32>
    %476 = arith.addf %473, %475 : vector<8x128xf32>
    %477 = vector.broadcast %38 : f32 to vector<8x128xf32>
    %478 = arith.mulf %331, %477 : vector<8x128xf32>
    %479 = arith.addf %476, %478 : vector<8x128xf32>
    %480 = vector.broadcast %39 : f32 to vector<8x128xf32>
    %481 = arith.mulf %334, %480 : vector<8x128xf32>
    %482 = arith.addf %479, %481 : vector<8x128xf32>
    %cst_16 = arith.constant 0.000000e+00 : f32
    %483 = vector.broadcast %cst_16 : f32 to vector<8x128xf32>
    %484 = arith.maximumf %482, %483 : vector<8x128xf32>
    %485 = vector.broadcast %40 : f32 to vector<8x128xf32>
    %486 = arith.mulf %325, %485 : vector<8x128xf32>
    %487 = vector.broadcast %90 : f32 to vector<8x128xf32>
    %488 = arith.addf %486, %487 : vector<8x128xf32>
    %489 = vector.broadcast %41 : f32 to vector<8x128xf32>
    %490 = arith.mulf %328, %489 : vector<8x128xf32>
    %491 = arith.addf %488, %490 : vector<8x128xf32>
    %492 = vector.broadcast %42 : f32 to vector<8x128xf32>
    %493 = arith.mulf %331, %492 : vector<8x128xf32>
    %494 = arith.addf %491, %493 : vector<8x128xf32>
    %495 = vector.broadcast %43 : f32 to vector<8x128xf32>
    %496 = arith.mulf %334, %495 : vector<8x128xf32>
    %497 = arith.addf %494, %496 : vector<8x128xf32>
    %cst_17 = arith.constant 0.000000e+00 : f32
    %498 = vector.broadcast %cst_17 : f32 to vector<8x128xf32>
    %499 = arith.maximumf %497, %498 : vector<8x128xf32>
    %500 = vector.broadcast %44 : f32 to vector<8x128xf32>
    %501 = arith.mulf %325, %500 : vector<8x128xf32>
    %502 = vector.broadcast %91 : f32 to vector<8x128xf32>
    %503 = arith.addf %501, %502 : vector<8x128xf32>
    %504 = vector.broadcast %45 : f32 to vector<8x128xf32>
    %505 = arith.mulf %328, %504 : vector<8x128xf32>
    %506 = arith.addf %503, %505 : vector<8x128xf32>
    %507 = vector.broadcast %46 : f32 to vector<8x128xf32>
    %508 = arith.mulf %331, %507 : vector<8x128xf32>
    %509 = arith.addf %506, %508 : vector<8x128xf32>
    %510 = vector.broadcast %47 : f32 to vector<8x128xf32>
    %511 = arith.mulf %334, %510 : vector<8x128xf32>
    %512 = arith.addf %509, %511 : vector<8x128xf32>
    %cst_18 = arith.constant 0.000000e+00 : f32
    %513 = vector.broadcast %cst_18 : f32 to vector<8x128xf32>
    %514 = arith.maximumf %512, %513 : vector<8x128xf32>
    %515 = vector.broadcast %48 : f32 to vector<8x128xf32>
    %516 = arith.mulf %325, %515 : vector<8x128xf32>
    %517 = vector.broadcast %92 : f32 to vector<8x128xf32>
    %518 = arith.addf %516, %517 : vector<8x128xf32>
    %519 = vector.broadcast %49 : f32 to vector<8x128xf32>
    %520 = arith.mulf %328, %519 : vector<8x128xf32>
    %521 = arith.addf %518, %520 : vector<8x128xf32>
    %522 = vector.broadcast %50 : f32 to vector<8x128xf32>
    %523 = arith.mulf %331, %522 : vector<8x128xf32>
    %524 = arith.addf %521, %523 : vector<8x128xf32>
    %525 = vector.broadcast %51 : f32 to vector<8x128xf32>
    %526 = arith.mulf %334, %525 : vector<8x128xf32>
    %527 = arith.addf %524, %526 : vector<8x128xf32>
    %cst_19 = arith.constant 0.000000e+00 : f32
    %528 = vector.broadcast %cst_19 : f32 to vector<8x128xf32>
    %529 = arith.maximumf %527, %528 : vector<8x128xf32>
    %530 = vector.broadcast %52 : f32 to vector<8x128xf32>
    %531 = arith.mulf %325, %530 : vector<8x128xf32>
    %532 = vector.broadcast %93 : f32 to vector<8x128xf32>
    %533 = arith.addf %531, %532 : vector<8x128xf32>
    %534 = vector.broadcast %53 : f32 to vector<8x128xf32>
    %535 = arith.mulf %328, %534 : vector<8x128xf32>
    %536 = arith.addf %533, %535 : vector<8x128xf32>
    %537 = vector.broadcast %54 : f32 to vector<8x128xf32>
    %538 = arith.mulf %331, %537 : vector<8x128xf32>
    %539 = arith.addf %536, %538 : vector<8x128xf32>
    %540 = vector.broadcast %55 : f32 to vector<8x128xf32>
    %541 = arith.mulf %334, %540 : vector<8x128xf32>
    %542 = arith.addf %539, %541 : vector<8x128xf32>
    %cst_20 = arith.constant 0.000000e+00 : f32
    %543 = vector.broadcast %cst_20 : f32 to vector<8x128xf32>
    %544 = arith.maximumf %542, %543 : vector<8x128xf32>
    %545 = vector.broadcast %56 : f32 to vector<8x128xf32>
    %546 = arith.mulf %325, %545 : vector<8x128xf32>
    %547 = vector.broadcast %94 : f32 to vector<8x128xf32>
    %548 = arith.addf %546, %547 : vector<8x128xf32>
    %549 = vector.broadcast %57 : f32 to vector<8x128xf32>
    %550 = arith.mulf %328, %549 : vector<8x128xf32>
    %551 = arith.addf %548, %550 : vector<8x128xf32>
    %552 = vector.broadcast %58 : f32 to vector<8x128xf32>
    %553 = arith.mulf %331, %552 : vector<8x128xf32>
    %554 = arith.addf %551, %553 : vector<8x128xf32>
    %555 = vector.broadcast %59 : f32 to vector<8x128xf32>
    %556 = arith.mulf %334, %555 : vector<8x128xf32>
    %557 = arith.addf %554, %556 : vector<8x128xf32>
    %cst_21 = arith.constant 0.000000e+00 : f32
    %558 = vector.broadcast %cst_21 : f32 to vector<8x128xf32>
    %559 = arith.maximumf %557, %558 : vector<8x128xf32>
    %560 = vector.broadcast %60 : f32 to vector<8x128xf32>
    %561 = arith.mulf %325, %560 : vector<8x128xf32>
    %562 = vector.broadcast %95 : f32 to vector<8x128xf32>
    %563 = arith.addf %561, %562 : vector<8x128xf32>
    %564 = vector.broadcast %61 : f32 to vector<8x128xf32>
    %565 = arith.mulf %328, %564 : vector<8x128xf32>
    %566 = arith.addf %563, %565 : vector<8x128xf32>
    %567 = vector.broadcast %62 : f32 to vector<8x128xf32>
    %568 = arith.mulf %331, %567 : vector<8x128xf32>
    %569 = arith.addf %566, %568 : vector<8x128xf32>
    %570 = vector.broadcast %63 : f32 to vector<8x128xf32>
    %571 = arith.mulf %334, %570 : vector<8x128xf32>
    %572 = arith.addf %569, %571 : vector<8x128xf32>
    %cst_22 = arith.constant 0.000000e+00 : f32
    %573 = vector.broadcast %cst_22 : f32 to vector<8x128xf32>
    %574 = arith.maximumf %572, %573 : vector<8x128xf32>
    %575 = vector.broadcast %64 : f32 to vector<8x128xf32>
    %576 = arith.mulf %325, %575 : vector<8x128xf32>
    %577 = vector.broadcast %96 : f32 to vector<8x128xf32>
    %578 = arith.addf %576, %577 : vector<8x128xf32>
    %579 = vector.broadcast %65 : f32 to vector<8x128xf32>
    %580 = arith.mulf %328, %579 : vector<8x128xf32>
    %581 = arith.addf %578, %580 : vector<8x128xf32>
    %582 = vector.broadcast %66 : f32 to vector<8x128xf32>
    %583 = arith.mulf %331, %582 : vector<8x128xf32>
    %584 = arith.addf %581, %583 : vector<8x128xf32>
    %585 = vector.broadcast %67 : f32 to vector<8x128xf32>
    %586 = arith.mulf %334, %585 : vector<8x128xf32>
    %587 = arith.addf %584, %586 : vector<8x128xf32>
    %cst_23 = arith.constant 0.000000e+00 : f32
    %588 = vector.broadcast %cst_23 : f32 to vector<8x128xf32>
    %589 = arith.maximumf %587, %588 : vector<8x128xf32>
    %590 = vector.broadcast %68 : f32 to vector<8x128xf32>
    %591 = arith.mulf %325, %590 : vector<8x128xf32>
    %592 = vector.broadcast %97 : f32 to vector<8x128xf32>
    %593 = arith.addf %591, %592 : vector<8x128xf32>
    %594 = vector.broadcast %69 : f32 to vector<8x128xf32>
    %595 = arith.mulf %328, %594 : vector<8x128xf32>
    %596 = arith.addf %593, %595 : vector<8x128xf32>
    %597 = vector.broadcast %70 : f32 to vector<8x128xf32>
    %598 = arith.mulf %331, %597 : vector<8x128xf32>
    %599 = arith.addf %596, %598 : vector<8x128xf32>
    %600 = vector.broadcast %71 : f32 to vector<8x128xf32>
    %601 = arith.mulf %334, %600 : vector<8x128xf32>
    %602 = arith.addf %599, %601 : vector<8x128xf32>
    %cst_24 = arith.constant 0.000000e+00 : f32
    %603 = vector.broadcast %cst_24 : f32 to vector<8x128xf32>
    %604 = arith.maximumf %602, %603 : vector<8x128xf32>
    %605 = vector.broadcast %72 : f32 to vector<8x128xf32>
    %606 = arith.mulf %325, %605 : vector<8x128xf32>
    %607 = vector.broadcast %98 : f32 to vector<8x128xf32>
    %608 = arith.addf %606, %607 : vector<8x128xf32>
    %609 = vector.broadcast %73 : f32 to vector<8x128xf32>
    %610 = arith.mulf %328, %609 : vector<8x128xf32>
    %611 = arith.addf %608, %610 : vector<8x128xf32>
    %612 = vector.broadcast %74 : f32 to vector<8x128xf32>
    %613 = arith.mulf %331, %612 : vector<8x128xf32>
    %614 = arith.addf %611, %613 : vector<8x128xf32>
    %615 = vector.broadcast %75 : f32 to vector<8x128xf32>
    %616 = arith.mulf %334, %615 : vector<8x128xf32>
    %617 = arith.addf %614, %616 : vector<8x128xf32>
    %cst_25 = arith.constant 0.000000e+00 : f32
    %618 = vector.broadcast %cst_25 : f32 to vector<8x128xf32>
    %619 = arith.maximumf %617, %618 : vector<8x128xf32>
    %620 = vector.broadcast %76 : f32 to vector<8x128xf32>
    %621 = arith.mulf %325, %620 : vector<8x128xf32>
    %622 = vector.broadcast %99 : f32 to vector<8x128xf32>
    %623 = arith.addf %621, %622 : vector<8x128xf32>
    %624 = vector.broadcast %77 : f32 to vector<8x128xf32>
    %625 = arith.mulf %328, %624 : vector<8x128xf32>
    %626 = arith.addf %623, %625 : vector<8x128xf32>
    %627 = vector.broadcast %78 : f32 to vector<8x128xf32>
    %628 = arith.mulf %331, %627 : vector<8x128xf32>
    %629 = arith.addf %626, %628 : vector<8x128xf32>
    %630 = vector.broadcast %79 : f32 to vector<8x128xf32>
    %631 = arith.mulf %334, %630 : vector<8x128xf32>
    %632 = arith.addf %629, %631 : vector<8x128xf32>
    %cst_26 = arith.constant 0.000000e+00 : f32
    %633 = vector.broadcast %cst_26 : f32 to vector<8x128xf32>
    %634 = arith.maximumf %632, %633 : vector<8x128xf32>
    %635 = vector.broadcast %100 : f32 to vector<8x128xf32>
    %636 = arith.mulf %349, %635 : vector<8x128xf32>
    %637 = vector.broadcast %300 : f32 to vector<8x128xf32>
    %638 = arith.addf %636, %637 : vector<8x128xf32>
    %639 = vector.broadcast %101 : f32 to vector<8x128xf32>
    %640 = arith.mulf %364, %639 : vector<8x128xf32>
    %641 = arith.addf %638, %640 : vector<8x128xf32>
    %642 = vector.broadcast %102 : f32 to vector<8x128xf32>
    %643 = arith.mulf %379, %642 : vector<8x128xf32>
    %644 = arith.addf %641, %643 : vector<8x128xf32>
    %645 = vector.broadcast %103 : f32 to vector<8x128xf32>
    %646 = arith.mulf %394, %645 : vector<8x128xf32>
    %647 = arith.addf %644, %646 : vector<8x128xf32>
    %648 = vector.broadcast %104 : f32 to vector<8x128xf32>
    %649 = arith.mulf %409, %648 : vector<8x128xf32>
    %650 = arith.addf %647, %649 : vector<8x128xf32>
    %651 = vector.broadcast %105 : f32 to vector<8x128xf32>
    %652 = arith.mulf %424, %651 : vector<8x128xf32>
    %653 = arith.addf %650, %652 : vector<8x128xf32>
    %654 = vector.broadcast %106 : f32 to vector<8x128xf32>
    %655 = arith.mulf %439, %654 : vector<8x128xf32>
    %656 = arith.addf %653, %655 : vector<8x128xf32>
    %657 = vector.broadcast %107 : f32 to vector<8x128xf32>
    %658 = arith.mulf %454, %657 : vector<8x128xf32>
    %659 = arith.addf %656, %658 : vector<8x128xf32>
    %660 = vector.broadcast %108 : f32 to vector<8x128xf32>
    %661 = arith.mulf %469, %660 : vector<8x128xf32>
    %662 = arith.addf %659, %661 : vector<8x128xf32>
    %663 = vector.broadcast %109 : f32 to vector<8x128xf32>
    %664 = arith.mulf %484, %663 : vector<8x128xf32>
    %665 = arith.addf %662, %664 : vector<8x128xf32>
    %666 = vector.broadcast %110 : f32 to vector<8x128xf32>
    %667 = arith.mulf %499, %666 : vector<8x128xf32>
    %668 = arith.addf %665, %667 : vector<8x128xf32>
    %669 = vector.broadcast %111 : f32 to vector<8x128xf32>
    %670 = arith.mulf %514, %669 : vector<8x128xf32>
    %671 = arith.addf %668, %670 : vector<8x128xf32>
    %672 = vector.broadcast %112 : f32 to vector<8x128xf32>
    %673 = arith.mulf %529, %672 : vector<8x128xf32>
    %674 = arith.addf %671, %673 : vector<8x128xf32>
    %675 = vector.broadcast %113 : f32 to vector<8x128xf32>
    %676 = arith.mulf %544, %675 : vector<8x128xf32>
    %677 = arith.addf %674, %676 : vector<8x128xf32>
    %678 = vector.broadcast %114 : f32 to vector<8x128xf32>
    %679 = arith.mulf %559, %678 : vector<8x128xf32>
    %680 = arith.addf %677, %679 : vector<8x128xf32>
    %681 = vector.broadcast %115 : f32 to vector<8x128xf32>
    %682 = arith.mulf %574, %681 : vector<8x128xf32>
    %683 = arith.addf %680, %682 : vector<8x128xf32>
    %684 = vector.broadcast %116 : f32 to vector<8x128xf32>
    %685 = arith.mulf %589, %684 : vector<8x128xf32>
    %686 = arith.addf %683, %685 : vector<8x128xf32>
    %687 = vector.broadcast %117 : f32 to vector<8x128xf32>
    %688 = arith.mulf %604, %687 : vector<8x128xf32>
    %689 = arith.addf %686, %688 : vector<8x128xf32>
    %690 = vector.broadcast %118 : f32 to vector<8x128xf32>
    %691 = arith.mulf %619, %690 : vector<8x128xf32>
    %692 = arith.addf %689, %691 : vector<8x128xf32>
    %693 = vector.broadcast %119 : f32 to vector<8x128xf32>
    %694 = arith.mulf %634, %693 : vector<8x128xf32>
    %695 = arith.addf %692, %694 : vector<8x128xf32>
    %cst_27 = arith.constant 0.000000e+00 : f32
    %696 = vector.broadcast %cst_27 : f32 to vector<8x128xf32>
    %697 = arith.maximumf %695, %696 : vector<8x128xf32>
    %698 = vector.broadcast %120 : f32 to vector<8x128xf32>
    %699 = arith.mulf %349, %698 : vector<8x128xf32>
    %700 = vector.broadcast %301 : f32 to vector<8x128xf32>
    %701 = arith.addf %699, %700 : vector<8x128xf32>
    %702 = vector.broadcast %121 : f32 to vector<8x128xf32>
    %703 = arith.mulf %364, %702 : vector<8x128xf32>
    %704 = arith.addf %701, %703 : vector<8x128xf32>
    %705 = vector.broadcast %122 : f32 to vector<8x128xf32>
    %706 = arith.mulf %379, %705 : vector<8x128xf32>
    %707 = arith.addf %704, %706 : vector<8x128xf32>
    %708 = vector.broadcast %123 : f32 to vector<8x128xf32>
    %709 = arith.mulf %394, %708 : vector<8x128xf32>
    %710 = arith.addf %707, %709 : vector<8x128xf32>
    %711 = vector.broadcast %124 : f32 to vector<8x128xf32>
    %712 = arith.mulf %409, %711 : vector<8x128xf32>
    %713 = arith.addf %710, %712 : vector<8x128xf32>
    %714 = vector.broadcast %125 : f32 to vector<8x128xf32>
    %715 = arith.mulf %424, %714 : vector<8x128xf32>
    %716 = arith.addf %713, %715 : vector<8x128xf32>
    %717 = vector.broadcast %126 : f32 to vector<8x128xf32>
    %718 = arith.mulf %439, %717 : vector<8x128xf32>
    %719 = arith.addf %716, %718 : vector<8x128xf32>
    %720 = vector.broadcast %127 : f32 to vector<8x128xf32>
    %721 = arith.mulf %454, %720 : vector<8x128xf32>
    %722 = arith.addf %719, %721 : vector<8x128xf32>
    %723 = vector.broadcast %128 : f32 to vector<8x128xf32>
    %724 = arith.mulf %469, %723 : vector<8x128xf32>
    %725 = arith.addf %722, %724 : vector<8x128xf32>
    %726 = vector.broadcast %129 : f32 to vector<8x128xf32>
    %727 = arith.mulf %484, %726 : vector<8x128xf32>
    %728 = arith.addf %725, %727 : vector<8x128xf32>
    %729 = vector.broadcast %130 : f32 to vector<8x128xf32>
    %730 = arith.mulf %499, %729 : vector<8x128xf32>
    %731 = arith.addf %728, %730 : vector<8x128xf32>
    %732 = vector.broadcast %131 : f32 to vector<8x128xf32>
    %733 = arith.mulf %514, %732 : vector<8x128xf32>
    %734 = arith.addf %731, %733 : vector<8x128xf32>
    %735 = vector.broadcast %132 : f32 to vector<8x128xf32>
    %736 = arith.mulf %529, %735 : vector<8x128xf32>
    %737 = arith.addf %734, %736 : vector<8x128xf32>
    %738 = vector.broadcast %133 : f32 to vector<8x128xf32>
    %739 = arith.mulf %544, %738 : vector<8x128xf32>
    %740 = arith.addf %737, %739 : vector<8x128xf32>
    %741 = vector.broadcast %134 : f32 to vector<8x128xf32>
    %742 = arith.mulf %559, %741 : vector<8x128xf32>
    %743 = arith.addf %740, %742 : vector<8x128xf32>
    %744 = vector.broadcast %135 : f32 to vector<8x128xf32>
    %745 = arith.mulf %574, %744 : vector<8x128xf32>
    %746 = arith.addf %743, %745 : vector<8x128xf32>
    %747 = vector.broadcast %136 : f32 to vector<8x128xf32>
    %748 = arith.mulf %589, %747 : vector<8x128xf32>
    %749 = arith.addf %746, %748 : vector<8x128xf32>
    %750 = vector.broadcast %137 : f32 to vector<8x128xf32>
    %751 = arith.mulf %604, %750 : vector<8x128xf32>
    %752 = arith.addf %749, %751 : vector<8x128xf32>
    %753 = vector.broadcast %138 : f32 to vector<8x128xf32>
    %754 = arith.mulf %619, %753 : vector<8x128xf32>
    %755 = arith.addf %752, %754 : vector<8x128xf32>
    %756 = vector.broadcast %139 : f32 to vector<8x128xf32>
    %757 = arith.mulf %634, %756 : vector<8x128xf32>
    %758 = arith.addf %755, %757 : vector<8x128xf32>
    %cst_28 = arith.constant 0.000000e+00 : f32
    %759 = vector.broadcast %cst_28 : f32 to vector<8x128xf32>
    %760 = arith.maximumf %758, %759 : vector<8x128xf32>
    %761 = vector.broadcast %140 : f32 to vector<8x128xf32>
    %762 = arith.mulf %349, %761 : vector<8x128xf32>
    %763 = vector.broadcast %302 : f32 to vector<8x128xf32>
    %764 = arith.addf %762, %763 : vector<8x128xf32>
    %765 = vector.broadcast %141 : f32 to vector<8x128xf32>
    %766 = arith.mulf %364, %765 : vector<8x128xf32>
    %767 = arith.addf %764, %766 : vector<8x128xf32>
    %768 = vector.broadcast %142 : f32 to vector<8x128xf32>
    %769 = arith.mulf %379, %768 : vector<8x128xf32>
    %770 = arith.addf %767, %769 : vector<8x128xf32>
    %771 = vector.broadcast %143 : f32 to vector<8x128xf32>
    %772 = arith.mulf %394, %771 : vector<8x128xf32>
    %773 = arith.addf %770, %772 : vector<8x128xf32>
    %774 = vector.broadcast %144 : f32 to vector<8x128xf32>
    %775 = arith.mulf %409, %774 : vector<8x128xf32>
    %776 = arith.addf %773, %775 : vector<8x128xf32>
    %777 = vector.broadcast %145 : f32 to vector<8x128xf32>
    %778 = arith.mulf %424, %777 : vector<8x128xf32>
    %779 = arith.addf %776, %778 : vector<8x128xf32>
    %780 = vector.broadcast %146 : f32 to vector<8x128xf32>
    %781 = arith.mulf %439, %780 : vector<8x128xf32>
    %782 = arith.addf %779, %781 : vector<8x128xf32>
    %783 = vector.broadcast %147 : f32 to vector<8x128xf32>
    %784 = arith.mulf %454, %783 : vector<8x128xf32>
    %785 = arith.addf %782, %784 : vector<8x128xf32>
    %786 = vector.broadcast %148 : f32 to vector<8x128xf32>
    %787 = arith.mulf %469, %786 : vector<8x128xf32>
    %788 = arith.addf %785, %787 : vector<8x128xf32>
    %789 = vector.broadcast %149 : f32 to vector<8x128xf32>
    %790 = arith.mulf %484, %789 : vector<8x128xf32>
    %791 = arith.addf %788, %790 : vector<8x128xf32>
    %792 = vector.broadcast %150 : f32 to vector<8x128xf32>
    %793 = arith.mulf %499, %792 : vector<8x128xf32>
    %794 = arith.addf %791, %793 : vector<8x128xf32>
    %795 = vector.broadcast %151 : f32 to vector<8x128xf32>
    %796 = arith.mulf %514, %795 : vector<8x128xf32>
    %797 = arith.addf %794, %796 : vector<8x128xf32>
    %798 = vector.broadcast %152 : f32 to vector<8x128xf32>
    %799 = arith.mulf %529, %798 : vector<8x128xf32>
    %800 = arith.addf %797, %799 : vector<8x128xf32>
    %801 = vector.broadcast %153 : f32 to vector<8x128xf32>
    %802 = arith.mulf %544, %801 : vector<8x128xf32>
    %803 = arith.addf %800, %802 : vector<8x128xf32>
    %804 = vector.broadcast %154 : f32 to vector<8x128xf32>
    %805 = arith.mulf %559, %804 : vector<8x128xf32>
    %806 = arith.addf %803, %805 : vector<8x128xf32>
    %807 = vector.broadcast %155 : f32 to vector<8x128xf32>
    %808 = arith.mulf %574, %807 : vector<8x128xf32>
    %809 = arith.addf %806, %808 : vector<8x128xf32>
    %810 = vector.broadcast %156 : f32 to vector<8x128xf32>
    %811 = arith.mulf %589, %810 : vector<8x128xf32>
    %812 = arith.addf %809, %811 : vector<8x128xf32>
    %813 = vector.broadcast %157 : f32 to vector<8x128xf32>
    %814 = arith.mulf %604, %813 : vector<8x128xf32>
    %815 = arith.addf %812, %814 : vector<8x128xf32>
    %816 = vector.broadcast %158 : f32 to vector<8x128xf32>
    %817 = arith.mulf %619, %816 : vector<8x128xf32>
    %818 = arith.addf %815, %817 : vector<8x128xf32>
    %819 = vector.broadcast %159 : f32 to vector<8x128xf32>
    %820 = arith.mulf %634, %819 : vector<8x128xf32>
    %821 = arith.addf %818, %820 : vector<8x128xf32>
    %cst_29 = arith.constant 0.000000e+00 : f32
    %822 = vector.broadcast %cst_29 : f32 to vector<8x128xf32>
    %823 = arith.maximumf %821, %822 : vector<8x128xf32>
    %824 = vector.broadcast %160 : f32 to vector<8x128xf32>
    %825 = arith.mulf %349, %824 : vector<8x128xf32>
    %826 = vector.broadcast %303 : f32 to vector<8x128xf32>
    %827 = arith.addf %825, %826 : vector<8x128xf32>
    %828 = vector.broadcast %161 : f32 to vector<8x128xf32>
    %829 = arith.mulf %364, %828 : vector<8x128xf32>
    %830 = arith.addf %827, %829 : vector<8x128xf32>
    %831 = vector.broadcast %162 : f32 to vector<8x128xf32>
    %832 = arith.mulf %379, %831 : vector<8x128xf32>
    %833 = arith.addf %830, %832 : vector<8x128xf32>
    %834 = vector.broadcast %163 : f32 to vector<8x128xf32>
    %835 = arith.mulf %394, %834 : vector<8x128xf32>
    %836 = arith.addf %833, %835 : vector<8x128xf32>
    %837 = vector.broadcast %164 : f32 to vector<8x128xf32>
    %838 = arith.mulf %409, %837 : vector<8x128xf32>
    %839 = arith.addf %836, %838 : vector<8x128xf32>
    %840 = vector.broadcast %165 : f32 to vector<8x128xf32>
    %841 = arith.mulf %424, %840 : vector<8x128xf32>
    %842 = arith.addf %839, %841 : vector<8x128xf32>
    %843 = vector.broadcast %166 : f32 to vector<8x128xf32>
    %844 = arith.mulf %439, %843 : vector<8x128xf32>
    %845 = arith.addf %842, %844 : vector<8x128xf32>
    %846 = vector.broadcast %167 : f32 to vector<8x128xf32>
    %847 = arith.mulf %454, %846 : vector<8x128xf32>
    %848 = arith.addf %845, %847 : vector<8x128xf32>
    %849 = vector.broadcast %168 : f32 to vector<8x128xf32>
    %850 = arith.mulf %469, %849 : vector<8x128xf32>
    %851 = arith.addf %848, %850 : vector<8x128xf32>
    %852 = vector.broadcast %169 : f32 to vector<8x128xf32>
    %853 = arith.mulf %484, %852 : vector<8x128xf32>
    %854 = arith.addf %851, %853 : vector<8x128xf32>
    %855 = vector.broadcast %170 : f32 to vector<8x128xf32>
    %856 = arith.mulf %499, %855 : vector<8x128xf32>
    %857 = arith.addf %854, %856 : vector<8x128xf32>
    %858 = vector.broadcast %171 : f32 to vector<8x128xf32>
    %859 = arith.mulf %514, %858 : vector<8x128xf32>
    %860 = arith.addf %857, %859 : vector<8x128xf32>
    %861 = vector.broadcast %172 : f32 to vector<8x128xf32>
    %862 = arith.mulf %529, %861 : vector<8x128xf32>
    %863 = arith.addf %860, %862 : vector<8x128xf32>
    %864 = vector.broadcast %173 : f32 to vector<8x128xf32>
    %865 = arith.mulf %544, %864 : vector<8x128xf32>
    %866 = arith.addf %863, %865 : vector<8x128xf32>
    %867 = vector.broadcast %174 : f32 to vector<8x128xf32>
    %868 = arith.mulf %559, %867 : vector<8x128xf32>
    %869 = arith.addf %866, %868 : vector<8x128xf32>
    %870 = vector.broadcast %175 : f32 to vector<8x128xf32>
    %871 = arith.mulf %574, %870 : vector<8x128xf32>
    %872 = arith.addf %869, %871 : vector<8x128xf32>
    %873 = vector.broadcast %176 : f32 to vector<8x128xf32>
    %874 = arith.mulf %589, %873 : vector<8x128xf32>
    %875 = arith.addf %872, %874 : vector<8x128xf32>
    %876 = vector.broadcast %177 : f32 to vector<8x128xf32>
    %877 = arith.mulf %604, %876 : vector<8x128xf32>
    %878 = arith.addf %875, %877 : vector<8x128xf32>
    %879 = vector.broadcast %178 : f32 to vector<8x128xf32>
    %880 = arith.mulf %619, %879 : vector<8x128xf32>
    %881 = arith.addf %878, %880 : vector<8x128xf32>
    %882 = vector.broadcast %179 : f32 to vector<8x128xf32>
    %883 = arith.mulf %634, %882 : vector<8x128xf32>
    %884 = arith.addf %881, %883 : vector<8x128xf32>
    %cst_30 = arith.constant 0.000000e+00 : f32
    %885 = vector.broadcast %cst_30 : f32 to vector<8x128xf32>
    %886 = arith.maximumf %884, %885 : vector<8x128xf32>
    %887 = vector.broadcast %180 : f32 to vector<8x128xf32>
    %888 = arith.mulf %349, %887 : vector<8x128xf32>
    %889 = vector.broadcast %304 : f32 to vector<8x128xf32>
    %890 = arith.addf %888, %889 : vector<8x128xf32>
    %891 = vector.broadcast %181 : f32 to vector<8x128xf32>
    %892 = arith.mulf %364, %891 : vector<8x128xf32>
    %893 = arith.addf %890, %892 : vector<8x128xf32>
    %894 = vector.broadcast %182 : f32 to vector<8x128xf32>
    %895 = arith.mulf %379, %894 : vector<8x128xf32>
    %896 = arith.addf %893, %895 : vector<8x128xf32>
    %897 = vector.broadcast %183 : f32 to vector<8x128xf32>
    %898 = arith.mulf %394, %897 : vector<8x128xf32>
    %899 = arith.addf %896, %898 : vector<8x128xf32>
    %900 = vector.broadcast %184 : f32 to vector<8x128xf32>
    %901 = arith.mulf %409, %900 : vector<8x128xf32>
    %902 = arith.addf %899, %901 : vector<8x128xf32>
    %903 = vector.broadcast %185 : f32 to vector<8x128xf32>
    %904 = arith.mulf %424, %903 : vector<8x128xf32>
    %905 = arith.addf %902, %904 : vector<8x128xf32>
    %906 = vector.broadcast %186 : f32 to vector<8x128xf32>
    %907 = arith.mulf %439, %906 : vector<8x128xf32>
    %908 = arith.addf %905, %907 : vector<8x128xf32>
    %909 = vector.broadcast %187 : f32 to vector<8x128xf32>
    %910 = arith.mulf %454, %909 : vector<8x128xf32>
    %911 = arith.addf %908, %910 : vector<8x128xf32>
    %912 = vector.broadcast %188 : f32 to vector<8x128xf32>
    %913 = arith.mulf %469, %912 : vector<8x128xf32>
    %914 = arith.addf %911, %913 : vector<8x128xf32>
    %915 = vector.broadcast %189 : f32 to vector<8x128xf32>
    %916 = arith.mulf %484, %915 : vector<8x128xf32>
    %917 = arith.addf %914, %916 : vector<8x128xf32>
    %918 = vector.broadcast %190 : f32 to vector<8x128xf32>
    %919 = arith.mulf %499, %918 : vector<8x128xf32>
    %920 = arith.addf %917, %919 : vector<8x128xf32>
    %921 = vector.broadcast %191 : f32 to vector<8x128xf32>
    %922 = arith.mulf %514, %921 : vector<8x128xf32>
    %923 = arith.addf %920, %922 : vector<8x128xf32>
    %924 = vector.broadcast %192 : f32 to vector<8x128xf32>
    %925 = arith.mulf %529, %924 : vector<8x128xf32>
    %926 = arith.addf %923, %925 : vector<8x128xf32>
    %927 = vector.broadcast %193 : f32 to vector<8x128xf32>
    %928 = arith.mulf %544, %927 : vector<8x128xf32>
    %929 = arith.addf %926, %928 : vector<8x128xf32>
    %930 = vector.broadcast %194 : f32 to vector<8x128xf32>
    %931 = arith.mulf %559, %930 : vector<8x128xf32>
    %932 = arith.addf %929, %931 : vector<8x128xf32>
    %933 = vector.broadcast %195 : f32 to vector<8x128xf32>
    %934 = arith.mulf %574, %933 : vector<8x128xf32>
    %935 = arith.addf %932, %934 : vector<8x128xf32>
    %936 = vector.broadcast %196 : f32 to vector<8x128xf32>
    %937 = arith.mulf %589, %936 : vector<8x128xf32>
    %938 = arith.addf %935, %937 : vector<8x128xf32>
    %939 = vector.broadcast %197 : f32 to vector<8x128xf32>
    %940 = arith.mulf %604, %939 : vector<8x128xf32>
    %941 = arith.addf %938, %940 : vector<8x128xf32>
    %942 = vector.broadcast %198 : f32 to vector<8x128xf32>
    %943 = arith.mulf %619, %942 : vector<8x128xf32>
    %944 = arith.addf %941, %943 : vector<8x128xf32>
    %945 = vector.broadcast %199 : f32 to vector<8x128xf32>
    %946 = arith.mulf %634, %945 : vector<8x128xf32>
    %947 = arith.addf %944, %946 : vector<8x128xf32>
    %cst_31 = arith.constant 0.000000e+00 : f32
    %948 = vector.broadcast %cst_31 : f32 to vector<8x128xf32>
    %949 = arith.maximumf %947, %948 : vector<8x128xf32>
    %950 = vector.broadcast %200 : f32 to vector<8x128xf32>
    %951 = arith.mulf %349, %950 : vector<8x128xf32>
    %952 = vector.broadcast %305 : f32 to vector<8x128xf32>
    %953 = arith.addf %951, %952 : vector<8x128xf32>
    %954 = vector.broadcast %201 : f32 to vector<8x128xf32>
    %955 = arith.mulf %364, %954 : vector<8x128xf32>
    %956 = arith.addf %953, %955 : vector<8x128xf32>
    %957 = vector.broadcast %202 : f32 to vector<8x128xf32>
    %958 = arith.mulf %379, %957 : vector<8x128xf32>
    %959 = arith.addf %956, %958 : vector<8x128xf32>
    %960 = vector.broadcast %203 : f32 to vector<8x128xf32>
    %961 = arith.mulf %394, %960 : vector<8x128xf32>
    %962 = arith.addf %959, %961 : vector<8x128xf32>
    %963 = vector.broadcast %204 : f32 to vector<8x128xf32>
    %964 = arith.mulf %409, %963 : vector<8x128xf32>
    %965 = arith.addf %962, %964 : vector<8x128xf32>
    %966 = vector.broadcast %205 : f32 to vector<8x128xf32>
    %967 = arith.mulf %424, %966 : vector<8x128xf32>
    %968 = arith.addf %965, %967 : vector<8x128xf32>
    %969 = vector.broadcast %206 : f32 to vector<8x128xf32>
    %970 = arith.mulf %439, %969 : vector<8x128xf32>
    %971 = arith.addf %968, %970 : vector<8x128xf32>
    %972 = vector.broadcast %207 : f32 to vector<8x128xf32>
    %973 = arith.mulf %454, %972 : vector<8x128xf32>
    %974 = arith.addf %971, %973 : vector<8x128xf32>
    %975 = vector.broadcast %208 : f32 to vector<8x128xf32>
    %976 = arith.mulf %469, %975 : vector<8x128xf32>
    %977 = arith.addf %974, %976 : vector<8x128xf32>
    %978 = vector.broadcast %209 : f32 to vector<8x128xf32>
    %979 = arith.mulf %484, %978 : vector<8x128xf32>
    %980 = arith.addf %977, %979 : vector<8x128xf32>
    %981 = vector.broadcast %210 : f32 to vector<8x128xf32>
    %982 = arith.mulf %499, %981 : vector<8x128xf32>
    %983 = arith.addf %980, %982 : vector<8x128xf32>
    %984 = vector.broadcast %211 : f32 to vector<8x128xf32>
    %985 = arith.mulf %514, %984 : vector<8x128xf32>
    %986 = arith.addf %983, %985 : vector<8x128xf32>
    %987 = vector.broadcast %212 : f32 to vector<8x128xf32>
    %988 = arith.mulf %529, %987 : vector<8x128xf32>
    %989 = arith.addf %986, %988 : vector<8x128xf32>
    %990 = vector.broadcast %213 : f32 to vector<8x128xf32>
    %991 = arith.mulf %544, %990 : vector<8x128xf32>
    %992 = arith.addf %989, %991 : vector<8x128xf32>
    %993 = vector.broadcast %214 : f32 to vector<8x128xf32>
    %994 = arith.mulf %559, %993 : vector<8x128xf32>
    %995 = arith.addf %992, %994 : vector<8x128xf32>
    %996 = vector.broadcast %215 : f32 to vector<8x128xf32>
    %997 = arith.mulf %574, %996 : vector<8x128xf32>
    %998 = arith.addf %995, %997 : vector<8x128xf32>
    %999 = vector.broadcast %216 : f32 to vector<8x128xf32>
    %1000 = arith.mulf %589, %999 : vector<8x128xf32>
    %1001 = arith.addf %998, %1000 : vector<8x128xf32>
    %1002 = vector.broadcast %217 : f32 to vector<8x128xf32>
    %1003 = arith.mulf %604, %1002 : vector<8x128xf32>
    %1004 = arith.addf %1001, %1003 : vector<8x128xf32>
    %1005 = vector.broadcast %218 : f32 to vector<8x128xf32>
    %1006 = arith.mulf %619, %1005 : vector<8x128xf32>
    %1007 = arith.addf %1004, %1006 : vector<8x128xf32>
    %1008 = vector.broadcast %219 : f32 to vector<8x128xf32>
    %1009 = arith.mulf %634, %1008 : vector<8x128xf32>
    %1010 = arith.addf %1007, %1009 : vector<8x128xf32>
    %cst_32 = arith.constant 0.000000e+00 : f32
    %1011 = vector.broadcast %cst_32 : f32 to vector<8x128xf32>
    %1012 = arith.maximumf %1010, %1011 : vector<8x128xf32>
    %1013 = vector.broadcast %220 : f32 to vector<8x128xf32>
    %1014 = arith.mulf %349, %1013 : vector<8x128xf32>
    %1015 = vector.broadcast %306 : f32 to vector<8x128xf32>
    %1016 = arith.addf %1014, %1015 : vector<8x128xf32>
    %1017 = vector.broadcast %221 : f32 to vector<8x128xf32>
    %1018 = arith.mulf %364, %1017 : vector<8x128xf32>
    %1019 = arith.addf %1016, %1018 : vector<8x128xf32>
    %1020 = vector.broadcast %222 : f32 to vector<8x128xf32>
    %1021 = arith.mulf %379, %1020 : vector<8x128xf32>
    %1022 = arith.addf %1019, %1021 : vector<8x128xf32>
    %1023 = vector.broadcast %223 : f32 to vector<8x128xf32>
    %1024 = arith.mulf %394, %1023 : vector<8x128xf32>
    %1025 = arith.addf %1022, %1024 : vector<8x128xf32>
    %1026 = vector.broadcast %224 : f32 to vector<8x128xf32>
    %1027 = arith.mulf %409, %1026 : vector<8x128xf32>
    %1028 = arith.addf %1025, %1027 : vector<8x128xf32>
    %1029 = vector.broadcast %225 : f32 to vector<8x128xf32>
    %1030 = arith.mulf %424, %1029 : vector<8x128xf32>
    %1031 = arith.addf %1028, %1030 : vector<8x128xf32>
    %1032 = vector.broadcast %226 : f32 to vector<8x128xf32>
    %1033 = arith.mulf %439, %1032 : vector<8x128xf32>
    %1034 = arith.addf %1031, %1033 : vector<8x128xf32>
    %1035 = vector.broadcast %227 : f32 to vector<8x128xf32>
    %1036 = arith.mulf %454, %1035 : vector<8x128xf32>
    %1037 = arith.addf %1034, %1036 : vector<8x128xf32>
    %1038 = vector.broadcast %228 : f32 to vector<8x128xf32>
    %1039 = arith.mulf %469, %1038 : vector<8x128xf32>
    %1040 = arith.addf %1037, %1039 : vector<8x128xf32>
    %1041 = vector.broadcast %229 : f32 to vector<8x128xf32>
    %1042 = arith.mulf %484, %1041 : vector<8x128xf32>
    %1043 = arith.addf %1040, %1042 : vector<8x128xf32>
    %1044 = vector.broadcast %230 : f32 to vector<8x128xf32>
    %1045 = arith.mulf %499, %1044 : vector<8x128xf32>
    %1046 = arith.addf %1043, %1045 : vector<8x128xf32>
    %1047 = vector.broadcast %231 : f32 to vector<8x128xf32>
    %1048 = arith.mulf %514, %1047 : vector<8x128xf32>
    %1049 = arith.addf %1046, %1048 : vector<8x128xf32>
    %1050 = vector.broadcast %232 : f32 to vector<8x128xf32>
    %1051 = arith.mulf %529, %1050 : vector<8x128xf32>
    %1052 = arith.addf %1049, %1051 : vector<8x128xf32>
    %1053 = vector.broadcast %233 : f32 to vector<8x128xf32>
    %1054 = arith.mulf %544, %1053 : vector<8x128xf32>
    %1055 = arith.addf %1052, %1054 : vector<8x128xf32>
    %1056 = vector.broadcast %234 : f32 to vector<8x128xf32>
    %1057 = arith.mulf %559, %1056 : vector<8x128xf32>
    %1058 = arith.addf %1055, %1057 : vector<8x128xf32>
    %1059 = vector.broadcast %235 : f32 to vector<8x128xf32>
    %1060 = arith.mulf %574, %1059 : vector<8x128xf32>
    %1061 = arith.addf %1058, %1060 : vector<8x128xf32>
    %1062 = vector.broadcast %236 : f32 to vector<8x128xf32>
    %1063 = arith.mulf %589, %1062 : vector<8x128xf32>
    %1064 = arith.addf %1061, %1063 : vector<8x128xf32>
    %1065 = vector.broadcast %237 : f32 to vector<8x128xf32>
    %1066 = arith.mulf %604, %1065 : vector<8x128xf32>
    %1067 = arith.addf %1064, %1066 : vector<8x128xf32>
    %1068 = vector.broadcast %238 : f32 to vector<8x128xf32>
    %1069 = arith.mulf %619, %1068 : vector<8x128xf32>
    %1070 = arith.addf %1067, %1069 : vector<8x128xf32>
    %1071 = vector.broadcast %239 : f32 to vector<8x128xf32>
    %1072 = arith.mulf %634, %1071 : vector<8x128xf32>
    %1073 = arith.addf %1070, %1072 : vector<8x128xf32>
    %cst_33 = arith.constant 0.000000e+00 : f32
    %1074 = vector.broadcast %cst_33 : f32 to vector<8x128xf32>
    %1075 = arith.maximumf %1073, %1074 : vector<8x128xf32>
    %1076 = vector.broadcast %240 : f32 to vector<8x128xf32>
    %1077 = arith.mulf %349, %1076 : vector<8x128xf32>
    %1078 = vector.broadcast %307 : f32 to vector<8x128xf32>
    %1079 = arith.addf %1077, %1078 : vector<8x128xf32>
    %1080 = vector.broadcast %241 : f32 to vector<8x128xf32>
    %1081 = arith.mulf %364, %1080 : vector<8x128xf32>
    %1082 = arith.addf %1079, %1081 : vector<8x128xf32>
    %1083 = vector.broadcast %242 : f32 to vector<8x128xf32>
    %1084 = arith.mulf %379, %1083 : vector<8x128xf32>
    %1085 = arith.addf %1082, %1084 : vector<8x128xf32>
    %1086 = vector.broadcast %243 : f32 to vector<8x128xf32>
    %1087 = arith.mulf %394, %1086 : vector<8x128xf32>
    %1088 = arith.addf %1085, %1087 : vector<8x128xf32>
    %1089 = vector.broadcast %244 : f32 to vector<8x128xf32>
    %1090 = arith.mulf %409, %1089 : vector<8x128xf32>
    %1091 = arith.addf %1088, %1090 : vector<8x128xf32>
    %1092 = vector.broadcast %245 : f32 to vector<8x128xf32>
    %1093 = arith.mulf %424, %1092 : vector<8x128xf32>
    %1094 = arith.addf %1091, %1093 : vector<8x128xf32>
    %1095 = vector.broadcast %246 : f32 to vector<8x128xf32>
    %1096 = arith.mulf %439, %1095 : vector<8x128xf32>
    %1097 = arith.addf %1094, %1096 : vector<8x128xf32>
    %1098 = vector.broadcast %247 : f32 to vector<8x128xf32>
    %1099 = arith.mulf %454, %1098 : vector<8x128xf32>
    %1100 = arith.addf %1097, %1099 : vector<8x128xf32>
    %1101 = vector.broadcast %248 : f32 to vector<8x128xf32>
    %1102 = arith.mulf %469, %1101 : vector<8x128xf32>
    %1103 = arith.addf %1100, %1102 : vector<8x128xf32>
    %1104 = vector.broadcast %249 : f32 to vector<8x128xf32>
    %1105 = arith.mulf %484, %1104 : vector<8x128xf32>
    %1106 = arith.addf %1103, %1105 : vector<8x128xf32>
    %1107 = vector.broadcast %250 : f32 to vector<8x128xf32>
    %1108 = arith.mulf %499, %1107 : vector<8x128xf32>
    %1109 = arith.addf %1106, %1108 : vector<8x128xf32>
    %1110 = vector.broadcast %251 : f32 to vector<8x128xf32>
    %1111 = arith.mulf %514, %1110 : vector<8x128xf32>
    %1112 = arith.addf %1109, %1111 : vector<8x128xf32>
    %1113 = vector.broadcast %252 : f32 to vector<8x128xf32>
    %1114 = arith.mulf %529, %1113 : vector<8x128xf32>
    %1115 = arith.addf %1112, %1114 : vector<8x128xf32>
    %1116 = vector.broadcast %253 : f32 to vector<8x128xf32>
    %1117 = arith.mulf %544, %1116 : vector<8x128xf32>
    %1118 = arith.addf %1115, %1117 : vector<8x128xf32>
    %1119 = vector.broadcast %254 : f32 to vector<8x128xf32>
    %1120 = arith.mulf %559, %1119 : vector<8x128xf32>
    %1121 = arith.addf %1118, %1120 : vector<8x128xf32>
    %1122 = vector.broadcast %255 : f32 to vector<8x128xf32>
    %1123 = arith.mulf %574, %1122 : vector<8x128xf32>
    %1124 = arith.addf %1121, %1123 : vector<8x128xf32>
    %1125 = vector.broadcast %256 : f32 to vector<8x128xf32>
    %1126 = arith.mulf %589, %1125 : vector<8x128xf32>
    %1127 = arith.addf %1124, %1126 : vector<8x128xf32>
    %1128 = vector.broadcast %257 : f32 to vector<8x128xf32>
    %1129 = arith.mulf %604, %1128 : vector<8x128xf32>
    %1130 = arith.addf %1127, %1129 : vector<8x128xf32>
    %1131 = vector.broadcast %258 : f32 to vector<8x128xf32>
    %1132 = arith.mulf %619, %1131 : vector<8x128xf32>
    %1133 = arith.addf %1130, %1132 : vector<8x128xf32>
    %1134 = vector.broadcast %259 : f32 to vector<8x128xf32>
    %1135 = arith.mulf %634, %1134 : vector<8x128xf32>
    %1136 = arith.addf %1133, %1135 : vector<8x128xf32>
    %cst_34 = arith.constant 0.000000e+00 : f32
    %1137 = vector.broadcast %cst_34 : f32 to vector<8x128xf32>
    %1138 = arith.maximumf %1136, %1137 : vector<8x128xf32>
    %1139 = vector.broadcast %260 : f32 to vector<8x128xf32>
    %1140 = arith.mulf %349, %1139 : vector<8x128xf32>
    %1141 = vector.broadcast %308 : f32 to vector<8x128xf32>
    %1142 = arith.addf %1140, %1141 : vector<8x128xf32>
    %1143 = vector.broadcast %261 : f32 to vector<8x128xf32>
    %1144 = arith.mulf %364, %1143 : vector<8x128xf32>
    %1145 = arith.addf %1142, %1144 : vector<8x128xf32>
    %1146 = vector.broadcast %262 : f32 to vector<8x128xf32>
    %1147 = arith.mulf %379, %1146 : vector<8x128xf32>
    %1148 = arith.addf %1145, %1147 : vector<8x128xf32>
    %1149 = vector.broadcast %263 : f32 to vector<8x128xf32>
    %1150 = arith.mulf %394, %1149 : vector<8x128xf32>
    %1151 = arith.addf %1148, %1150 : vector<8x128xf32>
    %1152 = vector.broadcast %264 : f32 to vector<8x128xf32>
    %1153 = arith.mulf %409, %1152 : vector<8x128xf32>
    %1154 = arith.addf %1151, %1153 : vector<8x128xf32>
    %1155 = vector.broadcast %265 : f32 to vector<8x128xf32>
    %1156 = arith.mulf %424, %1155 : vector<8x128xf32>
    %1157 = arith.addf %1154, %1156 : vector<8x128xf32>
    %1158 = vector.broadcast %266 : f32 to vector<8x128xf32>
    %1159 = arith.mulf %439, %1158 : vector<8x128xf32>
    %1160 = arith.addf %1157, %1159 : vector<8x128xf32>
    %1161 = vector.broadcast %267 : f32 to vector<8x128xf32>
    %1162 = arith.mulf %454, %1161 : vector<8x128xf32>
    %1163 = arith.addf %1160, %1162 : vector<8x128xf32>
    %1164 = vector.broadcast %268 : f32 to vector<8x128xf32>
    %1165 = arith.mulf %469, %1164 : vector<8x128xf32>
    %1166 = arith.addf %1163, %1165 : vector<8x128xf32>
    %1167 = vector.broadcast %269 : f32 to vector<8x128xf32>
    %1168 = arith.mulf %484, %1167 : vector<8x128xf32>
    %1169 = arith.addf %1166, %1168 : vector<8x128xf32>
    %1170 = vector.broadcast %270 : f32 to vector<8x128xf32>
    %1171 = arith.mulf %499, %1170 : vector<8x128xf32>
    %1172 = arith.addf %1169, %1171 : vector<8x128xf32>
    %1173 = vector.broadcast %271 : f32 to vector<8x128xf32>
    %1174 = arith.mulf %514, %1173 : vector<8x128xf32>
    %1175 = arith.addf %1172, %1174 : vector<8x128xf32>
    %1176 = vector.broadcast %272 : f32 to vector<8x128xf32>
    %1177 = arith.mulf %529, %1176 : vector<8x128xf32>
    %1178 = arith.addf %1175, %1177 : vector<8x128xf32>
    %1179 = vector.broadcast %273 : f32 to vector<8x128xf32>
    %1180 = arith.mulf %544, %1179 : vector<8x128xf32>
    %1181 = arith.addf %1178, %1180 : vector<8x128xf32>
    %1182 = vector.broadcast %274 : f32 to vector<8x128xf32>
    %1183 = arith.mulf %559, %1182 : vector<8x128xf32>
    %1184 = arith.addf %1181, %1183 : vector<8x128xf32>
    %1185 = vector.broadcast %275 : f32 to vector<8x128xf32>
    %1186 = arith.mulf %574, %1185 : vector<8x128xf32>
    %1187 = arith.addf %1184, %1186 : vector<8x128xf32>
    %1188 = vector.broadcast %276 : f32 to vector<8x128xf32>
    %1189 = arith.mulf %589, %1188 : vector<8x128xf32>
    %1190 = arith.addf %1187, %1189 : vector<8x128xf32>
    %1191 = vector.broadcast %277 : f32 to vector<8x128xf32>
    %1192 = arith.mulf %604, %1191 : vector<8x128xf32>
    %1193 = arith.addf %1190, %1192 : vector<8x128xf32>
    %1194 = vector.broadcast %278 : f32 to vector<8x128xf32>
    %1195 = arith.mulf %619, %1194 : vector<8x128xf32>
    %1196 = arith.addf %1193, %1195 : vector<8x128xf32>
    %1197 = vector.broadcast %279 : f32 to vector<8x128xf32>
    %1198 = arith.mulf %634, %1197 : vector<8x128xf32>
    %1199 = arith.addf %1196, %1198 : vector<8x128xf32>
    %cst_35 = arith.constant 0.000000e+00 : f32
    %1200 = vector.broadcast %cst_35 : f32 to vector<8x128xf32>
    %1201 = arith.maximumf %1199, %1200 : vector<8x128xf32>
    %1202 = vector.broadcast %280 : f32 to vector<8x128xf32>
    %1203 = arith.mulf %349, %1202 : vector<8x128xf32>
    %1204 = vector.broadcast %309 : f32 to vector<8x128xf32>
    %1205 = arith.addf %1203, %1204 : vector<8x128xf32>
    %1206 = vector.broadcast %281 : f32 to vector<8x128xf32>
    %1207 = arith.mulf %364, %1206 : vector<8x128xf32>
    %1208 = arith.addf %1205, %1207 : vector<8x128xf32>
    %1209 = vector.broadcast %282 : f32 to vector<8x128xf32>
    %1210 = arith.mulf %379, %1209 : vector<8x128xf32>
    %1211 = arith.addf %1208, %1210 : vector<8x128xf32>
    %1212 = vector.broadcast %283 : f32 to vector<8x128xf32>
    %1213 = arith.mulf %394, %1212 : vector<8x128xf32>
    %1214 = arith.addf %1211, %1213 : vector<8x128xf32>
    %1215 = vector.broadcast %284 : f32 to vector<8x128xf32>
    %1216 = arith.mulf %409, %1215 : vector<8x128xf32>
    %1217 = arith.addf %1214, %1216 : vector<8x128xf32>
    %1218 = vector.broadcast %285 : f32 to vector<8x128xf32>
    %1219 = arith.mulf %424, %1218 : vector<8x128xf32>
    %1220 = arith.addf %1217, %1219 : vector<8x128xf32>
    %1221 = vector.broadcast %286 : f32 to vector<8x128xf32>
    %1222 = arith.mulf %439, %1221 : vector<8x128xf32>
    %1223 = arith.addf %1220, %1222 : vector<8x128xf32>
    %1224 = vector.broadcast %287 : f32 to vector<8x128xf32>
    %1225 = arith.mulf %454, %1224 : vector<8x128xf32>
    %1226 = arith.addf %1223, %1225 : vector<8x128xf32>
    %1227 = vector.broadcast %288 : f32 to vector<8x128xf32>
    %1228 = arith.mulf %469, %1227 : vector<8x128xf32>
    %1229 = arith.addf %1226, %1228 : vector<8x128xf32>
    %1230 = vector.broadcast %289 : f32 to vector<8x128xf32>
    %1231 = arith.mulf %484, %1230 : vector<8x128xf32>
    %1232 = arith.addf %1229, %1231 : vector<8x128xf32>
    %1233 = vector.broadcast %290 : f32 to vector<8x128xf32>
    %1234 = arith.mulf %499, %1233 : vector<8x128xf32>
    %1235 = arith.addf %1232, %1234 : vector<8x128xf32>
    %1236 = vector.broadcast %291 : f32 to vector<8x128xf32>
    %1237 = arith.mulf %514, %1236 : vector<8x128xf32>
    %1238 = arith.addf %1235, %1237 : vector<8x128xf32>
    %1239 = vector.broadcast %292 : f32 to vector<8x128xf32>
    %1240 = arith.mulf %529, %1239 : vector<8x128xf32>
    %1241 = arith.addf %1238, %1240 : vector<8x128xf32>
    %1242 = vector.broadcast %293 : f32 to vector<8x128xf32>
    %1243 = arith.mulf %544, %1242 : vector<8x128xf32>
    %1244 = arith.addf %1241, %1243 : vector<8x128xf32>
    %1245 = vector.broadcast %294 : f32 to vector<8x128xf32>
    %1246 = arith.mulf %559, %1245 : vector<8x128xf32>
    %1247 = arith.addf %1244, %1246 : vector<8x128xf32>
    %1248 = vector.broadcast %295 : f32 to vector<8x128xf32>
    %1249 = arith.mulf %574, %1248 : vector<8x128xf32>
    %1250 = arith.addf %1247, %1249 : vector<8x128xf32>
    %1251 = vector.broadcast %296 : f32 to vector<8x128xf32>
    %1252 = arith.mulf %589, %1251 : vector<8x128xf32>
    %1253 = arith.addf %1250, %1252 : vector<8x128xf32>
    %1254 = vector.broadcast %297 : f32 to vector<8x128xf32>
    %1255 = arith.mulf %604, %1254 : vector<8x128xf32>
    %1256 = arith.addf %1253, %1255 : vector<8x128xf32>
    %1257 = vector.broadcast %298 : f32 to vector<8x128xf32>
    %1258 = arith.mulf %619, %1257 : vector<8x128xf32>
    %1259 = arith.addf %1256, %1258 : vector<8x128xf32>
    %1260 = vector.broadcast %299 : f32 to vector<8x128xf32>
    %1261 = arith.mulf %634, %1260 : vector<8x128xf32>
    %1262 = arith.addf %1259, %1261 : vector<8x128xf32>
    %cst_36 = arith.constant 0.000000e+00 : f32
    %1263 = vector.broadcast %cst_36 : f32 to vector<8x128xf32>
    %1264 = arith.maximumf %1262, %1263 : vector<8x128xf32>
    %1265 = vector.broadcast %310 : f32 to vector<8x128xf32>
    %1266 = arith.mulf %697, %1265 : vector<8x128xf32>
    %1267 = vector.broadcast %320 : f32 to vector<8x128xf32>
    %1268 = arith.addf %1266, %1267 : vector<8x128xf32>
    %1269 = vector.broadcast %311 : f32 to vector<8x128xf32>
    %1270 = arith.mulf %760, %1269 : vector<8x128xf32>
    %1271 = arith.addf %1268, %1270 : vector<8x128xf32>
    %1272 = vector.broadcast %312 : f32 to vector<8x128xf32>
    %1273 = arith.mulf %823, %1272 : vector<8x128xf32>
    %1274 = arith.addf %1271, %1273 : vector<8x128xf32>
    %1275 = vector.broadcast %313 : f32 to vector<8x128xf32>
    %1276 = arith.mulf %886, %1275 : vector<8x128xf32>
    %1277 = arith.addf %1274, %1276 : vector<8x128xf32>
    %1278 = vector.broadcast %314 : f32 to vector<8x128xf32>
    %1279 = arith.mulf %949, %1278 : vector<8x128xf32>
    %1280 = arith.addf %1277, %1279 : vector<8x128xf32>
    %1281 = vector.broadcast %315 : f32 to vector<8x128xf32>
    %1282 = arith.mulf %1012, %1281 : vector<8x128xf32>
    %1283 = arith.addf %1280, %1282 : vector<8x128xf32>
    %1284 = vector.broadcast %316 : f32 to vector<8x128xf32>
    %1285 = arith.mulf %1075, %1284 : vector<8x128xf32>
    %1286 = arith.addf %1283, %1285 : vector<8x128xf32>
    %1287 = vector.broadcast %317 : f32 to vector<8x128xf32>
    %1288 = arith.mulf %1138, %1287 : vector<8x128xf32>
    %1289 = arith.addf %1286, %1288 : vector<8x128xf32>
    %1290 = vector.broadcast %318 : f32 to vector<8x128xf32>
    %1291 = arith.mulf %1201, %1290 : vector<8x128xf32>
    %1292 = arith.addf %1289, %1291 : vector<8x128xf32>
    %1293 = vector.broadcast %319 : f32 to vector<8x128xf32>
    %1294 = arith.mulf %1264, %1293 : vector<8x128xf32>
    %1295 = arith.addf %1292, %1294 : vector<8x128xf32>
    %cst_37 = arith.constant 0.000000e+00 : f32
    %1296 = vector.broadcast %cst_37 : f32 to vector<8x128xf32>
    %1297 = arith.subf %1296, %1295 : vector<8x128xf32>
    %1298 = math.exp %1297 : vector<8x128xf32>
    %cst_38 = arith.constant 1.000000e+00 : f32
    %1299 = vector.broadcast %cst_38 : f32 to vector<8x128xf32>
    %1300 = arith.addf %1299, %1298 : vector<8x128xf32>
    %1301 = tpu.reciprocal %1300 {approx = true} : vector<8x128xf32> -> vector<8x128xf32>
    %c0_39 = arith.constant 0 : index
    %1302 = arith.index_cast %322 : i32 to index
    %1303 = vector.load %arg3[%c0_39, %1302] : memref<8x128xf32, #tpu.memory_space<vmem>>, vector<8x128xf32>
    tpu.vector_store %arg3[%c0_39, %1302], %1301 {strides = array<i32>} : memref<8x128xf32, #tpu.memory_space<vmem>>, vector<8x128xf32>,
    %c1_i32 = arith.constant 1 : i32
    return
  }
  func.func @transform_0(%arg0: i32) -> i32 {
    %c0_i32 = arith.constant 0 : i32
    %c0_i32_0 = arith.constant 0 : i32
    return %c0_i32 : i32
  }
  func.func @transform_1(%arg0: i32) -> (i32, i32, i32) {
    %c0_i32 = arith.constant 0 : i32
    %c0_i32_0 = arith.constant 0 : i32
    %c0_i32_1 = arith.constant 0 : i32
    return %c0_i32, %arg0, %c0_i32_0 : i32, i32, i32
  }
  func.func @transform_2(%arg0: i32) -> (i32, i32) {
    %c0_i32 = arith.constant 0 : i32
    %c0_i32_0 = arith.constant 0 : i32
    return %arg0, %c0_i32 : i32, i32
  }
}

</mosaic_0001>

<llo_original>
// kernel: tpu_custom_call.1
$region0: #{tpu_custom_call.1}
  #allocation0 [shape = 'u32[]', space=smem, size = 0x4, offset = 0x4, fixed_abs, tag = 'smem constant byte address 0x4 - core index']
  #allocation1 [shape = 'u32[144,128]{1,0:T(1,128)}', space=vmem, size = 0x12000, scoped, tag = 'internal scratch']
  %s0 = inlined_call_operand.hbm [shape: f32[321], index: 0, kind: input, shape index: {}]
  %s1 = inlined_call_operand.hbm [shape: f32[4,8,128], index: 1, kind: input, shape index: {}]
  %s2 = inlined_call_operand.hbm [shape: f32[8,128], index: 2, kind: output, shape index: {}]
  %s3 = sld [smem:[#allocation0]]
  $region26: #{tpu_custom_call.1} parent=0
    _
  %s5 = ssub.s32 1, %s3
  %s6 = scalar_select 0, %s5, %s3
  $region1: #{tpu_custom_call.1} parent=0
    #allocation2 [shape = 'u8[1536]{0}', space=smem, size = 0x600, scoped, tag = 'input window, operand 0, single buffered']
    #allocation3 [shape = 's32[1]{0}', space=sflag, size = 0x4, scoped, tag = 'scoped memory for tpu_custom_call.1']
    #allocation4 [shape = 's32[1]{0}', space=sflag, size = 0x4, scoped, tag = 'scoped memory for tpu_custom_call.1']
    #allocation5 [shape = 's32[1]{0}', space=sflag, size = 0x4, scoped, tag = 'scoped memory for tpu_custom_call.1']
    #allocation6 [shape = 'u8[16384]{0}', space=vmem, size = 0x4000, scoped, tag = 'input window, operand 1, single buffered']
    #allocation7 [shape = 'u8[4096]{0}', space=vmem, size = 0x1000, scoped, tag = 'output window, operand 0, single buffered']
    %7 = vsyncpa [#allocation5], 0
    %8 = vsyncpa [#allocation3], 0
    %9 = vsyncpa [#allocation4], 0
    // Predicated region
    $region2: #{tpu_custom_call.1} parent=1 // pred_check
      _
    $region3: #{tpu_custom_call.1} parent=1 // pred_check_branch
      %11 = sbr.rel (0) target = $region5
    $region4: #{tpu_custom_call.1} parent=1 // pred_region
      %s13 = ssub.s32 48, 48
      %14 = vsyncadd [#allocation5], %s13
      %17 = dma.hbm_to_smem %s0, 48, [#allocation2], [#allocation5]
    $region5: #{tpu_custom_call.1} parent=1 // pred_fallthru
      _
    // Predicated region
    $region6: #{tpu_custom_call.1} parent=1 // pred_check
      _
    $region7: #{tpu_custom_call.1} parent=1 // pred_check_branch
      %19 = sbr.rel (0) target = $region9
    $region8: #{tpu_custom_call.1} parent=1 // pred_region
      %s21 = ssub.s32 512, 512
      %22 = vsyncadd [#allocation3], %s21
      %s23 = sshll.u32 [#allocation6], 4
      %s24 = int_to_ptr.vmem [resolvable:$true] %s23
      %29 = dma.hbm_to_vmem [thread:$0]  %s1, 512, %s24, [#allocation3], 128, 128, 8
    $region9: #{tpu_custom_call.1} parent=1 // pred_fallthru
      _
    // Predicated region
    $region10: #{tpu_custom_call.1} parent=1 // pred_check
      _
    $region11: #{tpu_custom_call.1} parent=1 // pred_check_branch
      %31 = sbr.rel (0) target = $region13
    $region12: #{tpu_custom_call.1} parent=1 // pred_region
      %32 = dma.done [#allocation5], 48
    $region13: #{tpu_custom_call.1} parent=1 // pred_fallthru
      _
    // Predicated region
    $region14: #{tpu_custom_call.1} parent=1 // pred_check
      _
    $region15: #{tpu_custom_call.1} parent=1 // pred_check_branch
      %34 = sbr.rel (0) target = $region17
    $region16: #{tpu_custom_call.1} parent=1 // pred_region
      %35 = dma.done [#allocation3], 512
    $region17: #{tpu_custom_call.1} parent=1 // pred_fallthru
      _
    %36 = sfence
    %s37 = sld [smem:[#allocation2]]
    %s38 = sld [smem:[#allocation2 + $0x1]]
    %s39 = sld [smem:[#allocation2 + $0x2]]
    %s40 = sld [smem:[#allocation2 + $0x3]]
    %s41 = sld [smem:[#allocation2 + $0x4]]
    %s42 = sld [smem:[#allocation2 + $0x5]]
    %s43 = sld [smem:[#allocation2 + $0x6]]
    %s44 = sld [smem:[#allocation2 + $0x7]]
    %s45 = sld [smem:[#allocation2 + $0x8]]
    %s46 = sld [smem:[#allocation2 + $0x9]]
    %s47 = sld [smem:[#allocation2 + $0xa]]
    %s48 = sld [smem:[#allocation2 + $0xb]]
    %s49 = sld [smem:[#allocation2 + $0xc]]
    %s50 = sld [smem:[#allocation2 + $0xd]]
    %s51 = sld [smem:[#allocation2 + $0xe]]
    %s52 = sld [smem:[#allocation2 + $0xf]]
    %s53 = sld [smem:[#allocation2 + $0x10]]
    %s54 = sld [smem:[#allocation2 + $0x11]]
    %s55 = sld [smem:[#allocation2 + $0x12]]
    %s56 = sld [smem:[#allocation2 + $0x13]]
    %s57 = sld [smem:[#allocation2 + $0x14]]
    %s58 = sld [smem:[#allocation2 + $0x15]]
    %s59 = sld [smem:[#allocation2 + $0x16]]
    %s60 = sld [smem:[#allocation2 + $0x17]]
    %s61 = sld [smem:[#allocation2 + $0x18]]
    %s62 = sld [smem:[#allocation2 + $0x19]]
    %s63 = sld [smem:[#allocation2 + $0x1a]]
    %s64 = sld [smem:[#allocation2 + $0x1b]]
    %s65 = sld [smem:[#allocation2 + $0x1c]]
    %s66 = sld [smem:[#allocation2 + $0x1d]]
    %s67 = sld [smem:[#allocation2 + $0x1e]]
    %s68 = sld [smem:[#allocation2 + $0x1f]]
    %s69 = sld [smem:[#allocation2 + $0x20]]
    %s70 = sld [smem:[#allocation2 + $0x21]]
    %s71 = sld [smem:[#allocation2 + $0x22]]
    %s72 = sld [smem:[#allocation2 + $0x23]]
    %s73 = sld [smem:[#allocation2 + $0x24]]
    %s74 = sld [smem:[#allocation2 + $0x25]]
    %s75 = sld [smem:[#allocation2 + $0x26]]
    %s76 = sld [smem:[#allocation2 + $0x27]]
    %s77 = sld [smem:[#allocation2 + $0x28]]
    %s78 = sld [smem:[#allocation2 + $0x29]]
    %s79 = sld [smem:[#allocation2 + $0x2a]]
    %s80 = sld [smem:[#allocation2 + $0x2b]]
    %s81 = sld [smem:[#allocation2 + $0x2c]]
    %s82 = sld [smem:[#allocation2 + $0x2d]]
    %s83 = sld [smem:[#allocation2 + $0x2e]]
    %s84 = sld [smem:[#allocation2 + $0x2f]]
    %s85 = sld [smem:[#allocation2 + $0x30]]
    %s86 = sld [smem:[#allocation2 + $0x31]]
    %s87 = sld [smem:[#allocation2 + $0x32]]
    %s88 = sld [smem:[#allocation2 + $0x33]]
    %s89 = sld [smem:[#allocation2 + $0x34]]
    %s90 = sld [smem:[#allocation2 + $0x35]]
    %s91 = sld [smem:[#allocation2 + $0x36]]
    %s92 = sld [smem:[#allocation2 + $0x37]]
    %s93 = sld [smem:[#allocation2 + $0x38]]
    %s94 = sld [smem:[#allocation2 + $0x39]]
    %s95 = sld [smem:[#allocation2 + $0x3a]]
    %s96 = sld [smem:[#allocation2 + $0x3b]]
    %s97 = sld [smem:[#allocation2 + $0x3c]]
    %s98 = sld [smem:[#allocation2 + $0x3d]]
    %s99 = sld [smem:[#allocation2 + $0x3e]]
    %s100 = sld [smem:[#allocation2 + $0x3f]]
    %s101 = sld [smem:[#allocation2 + $0x40]]
    %s102 = sld [smem:[#allocation2 + $0x41]]
    %s103 = sld [smem:[#allocation2 + $0x42]]
    %s104 = sld [smem:[#allocation2 + $0x43]]
    %s105 = sld [smem:[#allocation2 + $0x44]]
    %s106 = sld [smem:[#allocation2 + $0x45]]
    %s107 = sld [smem:[#allocation2 + $0x46]]
    %s108 = sld [smem:[#allocation2 + $0x47]]
    %s109 = sld [smem:[#allocation2 + $0x48]]
    %s110 = sld [smem:[#allocation2 + $0x49]]
    %s111 = sld [smem:[#allocation2 + $0x4a]]
    %s112 = sld [smem:[#allocation2 + $0x4b]]
    %s113 = sld [smem:[#allocation2 + $0x4c]]
    %s114 = sld [smem:[#allocation2 + $0x4d]]
    %s115 = sld [smem:[#allocation2 + $0x4e]]
    %s116 = sld [smem:[#allocation2 + $0x4f]]
    %s117 = sld [smem:[#allocation2 + $0x50]]
    %s118 = sld [smem:[#allocation2 + $0x51]]
    %s119 = sld [smem:[#allocation2 + $0x52]]
    %s120 = sld [smem:[#allocation2 + $0x53]]
    %s121 = sld [smem:[#allocation2 + $0x54]]
    %s122 = sld [smem:[#allocation2 + $0x55]]
    %s123 = sld [smem:[#allocation2 + $0x56]]
    %s124 = sld [smem:[#allocation2 + $0x57]]
    %s125 = sld [smem:[#allocation2 + $0x58]]
    %s126 = sld [smem:[#allocation2 + $0x59]]
    %s127 = sld [smem:[#allocation2 + $0x5a]]
    %s128 = sld [smem:[#allocation2 + $0x5b]]
    %s129 = sld [smem:[#allocation2 + $0x5c]]
    %s130 = sld [smem:[#allocation2 + $0x5d]]
    %s131 = sld [smem:[#allocation2 + $0x5e]]
    %s132 = sld [smem:[#allocation2 + $0x5f]]
    %s133 = sld [smem:[#allocation2 + $0x60]]
    %s134 = sld [smem:[#allocation2 + $0x61]]
    %s135 = sld [smem:[#allocation2 + $0x62]]
    %s136 = sld [smem:[#allocation2 + $0x63]]
    %s137 = sld [smem:[#allocation2 + $0x64]]
    %s138 = sld [smem:[#allocation2 + $0x65]]
    %s139 = sld [smem:[#allocation2 + $0x66]]
    %s140 = sld [smem:[#allocation2 + $0x67]]
    %s141 = sld [smem:[#allocation2 + $0x68]]
    %s142 = sld [smem:[#allocation2 + $0x69]]
    %s143 = sld [smem:[#allocation2 + $0x6a]]
    %s144 = sld [smem:[#allocation2 + $0x6b]]
    %s145 = sld [smem:[#allocation2 + $0x6c]]
    %s146 = sld [smem:[#allocation2 + $0x6d]]
    %s147 = sld [smem:[#allocation2 + $0x6e]]
    %s148 = sld [smem:[#allocation2 + $0x6f]]
    %s149 = sld [smem:[#allocation2 + $0x70]]
    %s150 = sld [smem:[#allocation2 + $0x71]]
    %s151 = sld [smem:[#allocation2 + $0x72]]
    %s152 = sld [smem:[#allocation2 + $0x73]]
    %s153 = sld [smem:[#allocation2 + $0x74]]
    %s154 = sld [smem:[#allocation2 + $0x75]]
    %s155 = sld [smem:[#allocation2 + $0x76]]
    %s156 = sld [smem:[#allocation2 + $0x77]]
    %s157 = sld [smem:[#allocation2 + $0x78]]
    %s158 = sld [smem:[#allocation2 + $0x79]]
    %s159 = sld [smem:[#allocation2 + $0x7a]]
    %s160 = sld [smem:[#allocation2 + $0x7b]]
    %s161 = sld [smem:[#allocation2 + $0x7c]]
    %s162 = sld [smem:[#allocation2 + $0x7d]]
    %s163 = sld [smem:[#allocation2 + $0x7e]]
    %s164 = sld [smem:[#allocation2 + $0x7f]]
    %s165 = sld [smem:[#allocation2 + $0x80]]
    %s166 = sld [smem:[#allocation2 + $0x81]]
    %s167 = sld [smem:[#allocation2 + $0x82]]
    %s168 = sld [smem:[#allocation2 + $0x83]]
    %s169 = sld [smem:[#allocation2 + $0x84]]
    %s170 = sld [smem:[#allocation2 + $0x85]]
    %s171 = sld [smem:[#allocation2 + $0x86]]
    %s172 = sld [smem:[#allocation2 + $0x87]]
    %s173 = sld [smem:[#allocation2 + $0x88]]
    %s174 = sld [smem:[#allocation2 + $0x89]]
    %s175 = sld [smem:[#allocation2 + $0x8a]]
    %s176 = sld [smem:[#allocation2 + $0x8b]]
    %s177 = sld [smem:[#allocation2 + $0x8c]]
    %s178 = sld [smem:[#allocation2 + $0x8d]]
    %s179 = sld [smem:[#allocation2 + $0x8e]]
    %s180 = sld [smem:[#allocation2 + $0x8f]]
    %s181 = sld [smem:[#allocation2 + $0x90]]
    %s182 = sld [smem:[#allocation2 + $0x91]]
    %s183 = sld [smem:[#allocation2 + $0x92]]
    %s184 = sld [smem:[#allocation2 + $0x93]]
    %s185 = sld [smem:[#allocation2 + $0x94]]
    %s186 = sld [smem:[#allocation2 + $0x95]]
    %s187 = sld [smem:[#allocation2 + $0x96]]
    %s188 = sld [smem:[#allocation2 + $0x97]]
    %s189 = sld [smem:[#allocation2 + $0x98]]
    %s190 = sld [smem:[#allocation2 + $0x99]]
    %s191 = sld [smem:[#allocation2 + $0x9a]]
    %s192 = sld [smem:[#allocation2 + $0x9b]]
    %s193 = sld [smem:[#allocation2 + $0x9c]]
    %s194 = sld [smem:[#allocation2 + $0x9d]]
    %s195 = sld [smem:[#allocation2 + $0x9e]]
    %s196 = sld [smem:[#allocation2 + $0x9f]]
    %s197 = sld [smem:[#allocation2 + $0xa0]]
    %s198 = sld [smem:[#allocation2 + $0xa1]]
    %s199 = sld [smem:[#allocation2 + $0xa2]]
    %s200 = sld [smem:[#allocation2 + $0xa3]]
    %s201 = sld [smem:[#allocation2 + $0xa4]]
    %s202 = sld [smem:[#allocation2 + $0xa5]]
    %s203 = sld [smem:[#allocation2 + $0xa6]]
    %s204 = sld [smem:[#allocation2 + $0xa7]]
    %s205 = sld [smem:[#allocation2 + $0xa8]]
    %s206 = sld [smem:[#allocation2 + $0xa9]]
    %s207 = sld [smem:[#allocation2 + $0xaa]]
    %s208 = sld [smem:[#allocation2 + $0xab]]
    %s209 = sld [smem:[#allocation2 + $0xac]]
    %s210 = sld [smem:[#allocation2 + $0xad]]
    %s211 = sld [smem:[#allocation2 + $0xae]]
    %s212 = sld [smem:[#allocation2 + $0xaf]]
    %s213 = sld [smem:[#allocation2 + $0xb0]]
    %s214 = sld [smem:[#allocation2 + $0xb1]]
    %s215 = sld [smem:[#allocation2 + $0xb2]]
    %s216 = sld [smem:[#allocation2 + $0xb3]]
    %s217 = sld [smem:[#allocation2 + $0xb4]]
    %s218 = sld [smem:[#allocation2 + $0xb5]]
    %s219 = sld [smem:[#allocation2 + $0xb6]]
    %s220 = sld [smem:[#allocation2 + $0xb7]]
    %s221 = sld [smem:[#allocation2 + $0xb8]]
    %s222 = sld [smem:[#allocation2 + $0xb9]]
    %s223 = sld [smem:[#allocation2 + $0xba]]
    %s224 = sld [smem:[#allocation2 + $0xbb]]
    %s225 = sld [smem:[#allocation2 + $0xbc]]
    %s226 = sld [smem:[#allocation2 + $0xbd]]
    %s227 = sld [smem:[#allocation2 + $0xbe]]
    %s228 = sld [smem:[#allocation2 + $0xbf]]
    %s229 = sld [smem:[#allocation2 + $0xc0]]
    %s230 = sld [smem:[#allocation2 + $0xc1]]
    %s231 = sld [smem:[#allocation2 + $0xc2]]
    %s232 = sld [smem:[#allocation2 + $0xc3]]
    %s233 = sld [smem:[#allocation2 + $0xc4]]
    %s234 = sld [smem:[#allocation2 + $0xc5]]
    %s235 = sld [smem:[#allocation2 + $0xc6]]
    %s236 = sld [smem:[#allocation2 + $0xc7]]
    %s237 = sld [smem:[#allocation2 + $0xc8]]
    %s238 = sld [smem:[#allocation2 + $0xc9]]
    %s239 = sld [smem:[#allocation2 + $0xca]]
    %s240 = sld [smem:[#allocation2 + $0xcb]]
    %s241 = sld [smem:[#allocation2 + $0xcc]]
    %s242 = sld [smem:[#allocation2 + $0xcd]]
    %s243 = sld [smem:[#allocation2 + $0xce]]
    %s244 = sld [smem:[#allocation2 + $0xcf]]
    %s245 = sld [smem:[#allocation2 + $0xd0]]
    %s246 = sld [smem:[#allocation2 + $0xd1]]
    %s247 = sld [smem:[#allocation2 + $0xd2]]
    %s248 = sld [smem:[#allocation2 + $0xd3]]
    %s249 = sld [smem:[#allocation2 + $0xd4]]
    %s250 = sld [smem:[#allocation2 + $0xd5]]
    %s251 = sld [smem:[#allocation2 + $0xd6]]
    %s252 = sld [smem:[#allocation2 + $0xd7]]
    %s253 = sld [smem:[#allocation2 + $0xd8]]
    %s254 = sld [smem:[#allocation2 + $0xd9]]
    %s255 = sld [smem:[#allocation2 + $0xda]]
    %s256 = sld [smem:[#allocation2 + $0xdb]]
    %s257 = sld [smem:[#allocation2 + $0xdc]]
    %s258 = sld [smem:[#allocation2 + $0xdd]]
    %s259 = sld [smem:[#allocation2 + $0xde]]
    %s260 = sld [smem:[#allocation2 + $0xdf]]
    %s261 = sld [smem:[#allocation2 + $0xe0]]
    %s262 = sld [smem:[#allocation2 + $0xe1]]
    %s263 = sld [smem:[#allocation2 + $0xe2]]
    %s264 = sld [smem:[#allocation2 + $0xe3]]
    %s265 = sld [smem:[#allocation2 + $0xe4]]
    %s266 = sld [smem:[#allocation2 + $0xe5]]
    %s267 = sld [smem:[#allocation2 + $0xe6]]
    %s268 = sld [smem:[#allocation2 + $0xe7]]
    %s269 = sld [smem:[#allocation2 + $0xe8]]
    %s270 = sld [smem:[#allocation2 + $0xe9]]
    %s271 = sld [smem:[#allocation2 + $0xea]]
    %s272 = sld [smem:[#allocation2 + $0xeb]]
    %s273 = sld [smem:[#allocation2 + $0xec]]
    %s274 = sld [smem:[#allocation2 + $0xed]]
    %s275 = sld [smem:[#allocation2 + $0xee]]
    %s276 = sld [smem:[#allocation2 + $0xef]]
    %s277 = sld [smem:[#allocation2 + $0xf0]]
    %s278 = sld [smem:[#allocation2 + $0xf1]]
    %s279 = sld [smem:[#allocation2 + $0xf2]]
    %s280 = sld [smem:[#allocation2 + $0xf3]]
    %s281 = sld [smem:[#allocation2 + $0xf4]]
    %s282 = sld [smem:[#allocation2 + $0xf5]]
    %s283 = sld [smem:[#allocation2 + $0xf6]]
    %s284 = sld [smem:[#allocation2 + $0xf7]]
    %s285 = sld [smem:[#allocation2 + $0xf8]]
    %s286 = sld [smem:[#allocation2 + $0xf9]]
    %s287 = sld [smem:[#allocation2 + $0xfa]]
    %s288 = sld [smem:[#allocation2 + $0xfb]]
    %s289 = sld [smem:[#allocation2 + $0xfc]]
    %s290 = sld [smem:[#allocation2 + $0xfd]]
    %s291 = sld [smem:[#allocation2 + $0xfe]]
    %s292 = sld [smem:[#allocation2 + $0xff]]
    %s293 = sld [smem:[#allocation2 + $0x100]]
    %s294 = sld [smem:[#allocation2 + $0x101]]
    %s295 = sld [smem:[#allocation2 + $0x102]]
    %s296 = sld [smem:[#allocation2 + $0x103]]
    %s297 = sld [smem:[#allocation2 + $0x104]]
    %s298 = sld [smem:[#allocation2 + $0x105]]
    %s299 = sld [smem:[#allocation2 + $0x106]]
    %s300 = sld [smem:[#allocation2 + $0x107]]
    %s301 = sld [smem:[#allocation2 + $0x108]]
    %s302 = sld [smem:[#allocation2 + $0x109]]
    %s303 = sld [smem:[#allocation2 + $0x10a]]
    %s304 = sld [smem:[#allocation2 + $0x10b]]
    %s305 = sld [smem:[#allocation2 + $0x10c]]
    %s306 = sld [smem:[#allocation2 + $0x10d]]
    %s307 = sld [smem:[#allocation2 + $0x10e]]
    %s308 = sld [smem:[#allocation2 + $0x10f]]
    %s309 = sld [smem:[#allocation2 + $0x110]]
    %s310 = sld [smem:[#allocation2 + $0x111]]
    %s311 = sld [smem:[#allocation2 + $0x112]]
    %s312 = sld [smem:[#allocation2 + $0x113]]
    %s313 = sld [smem:[#allocation2 + $0x114]]
    %s314 = sld [smem:[#allocation2 + $0x115]]
    %s315 = sld [smem:[#allocation2 + $0x116]]
    %s316 = sld [smem:[#allocation2 + $0x117]]
    %s317 = sld [smem:[#allocation2 + $0x118]]
    %s318 = sld [smem:[#allocation2 + $0x119]]
    %s319 = sld [smem:[#allocation2 + $0x11a]]
    %s320 = sld [smem:[#allocation2 + $0x11b]]
    %s321 = sld [smem:[#allocation2 + $0x11c]]
    %s322 = sld [smem:[#allocation2 + $0x11d]]
    %s323 = sld [smem:[#allocation2 + $0x11e]]
    %s324 = sld [smem:[#allocation2 + $0x11f]]
    %s325 = sld [smem:[#allocation2 + $0x120]]
    %s326 = sld [smem:[#allocation2 + $0x121]]
    %s327 = sld [smem:[#allocation2 + $0x122]]
    %s328 = sld [smem:[#allocation2 + $0x123]]
    %s329 = sld [smem:[#allocation2 + $0x124]]
    %s330 = sld [smem:[#allocation2 + $0x125]]
    %s331 = sld [smem:[#allocation2 + $0x126]]
    %s332 = sld [smem:[#allocation2 + $0x127]]
    %s333 = sld [smem:[#allocation2 + $0x128]]
    %s334 = sld [smem:[#allocation2 + $0x129]]
    %s335 = sld [smem:[#allocation2 + $0x12a]]
    %s336 = sld [smem:[#allocation2 + $0x12b]]
    %s337 = sld [smem:[#allocation2 + $0x12c]]
    %s338 = sld [smem:[#allocation2 + $0x12d]]
    %s339 = sld [smem:[#allocation2 + $0x12e]]
    %s340 = sld [smem:[#allocation2 + $0x12f]]
    %s341 = sld [smem:[#allocation2 + $0x130]]
    %s342 = sld [smem:[#allocation2 + $0x131]]
    %s343 = sld [smem:[#allocation2 + $0x132]]
    %s344 = sld [smem:[#allocation2 + $0x133]]
    %s345 = sld [smem:[#allocation2 + $0x134]]
    %s346 = sld [smem:[#allocation2 + $0x135]]
    %s347 = sld [smem:[#allocation2 + $0x136]]
    %s348 = sld [smem:[#allocation2 + $0x137]]
    %s349 = sld [smem:[#allocation2 + $0x138]]
    %s350 = sld [smem:[#allocation2 + $0x139]]
    %s351 = sld [smem:[#allocation2 + $0x13a]]
    %s352 = sld [smem:[#allocation2 + $0x13b]]
    %s353 = sld [smem:[#allocation2 + $0x13c]]
    %s354 = sld [smem:[#allocation2 + $0x13d]]
    %s355 = sld [smem:[#allocation2 + $0x13e]]
    %s356 = sld [smem:[#allocation2 + $0x13f]]
    %s357 = sld [smem:[#allocation2 + $0x140]]
    %v358 = vld [vmem:[#allocation6] sm:$0xff]
    %s359 = sadd.s32 0, 8
    %s360 = scalar_lea.vmem [#allocation6], %s359
    %v361 = vld [vmem:[%s360] sm:$0xff]
    %s362 = sadd.s32 0, 16
    %s363 = scalar_lea.vmem [#allocation6], %s362
    %v364 = vld [vmem:[%s363] sm:$0xff]
    %s365 = sadd.s32 0, 24
    %s366 = scalar_lea.vmem [#allocation6], %s365
    %v367 = vld [vmem:[%s366] sm:$0xff]
    %v368 = vstv %s37
    %v369 = vmul.f32 %v358, %v368
    %v370 = vstv %s117
    %v371 = vadd.f32 %v369, %v370
    %v372 = vstv %s38
    %v373 = vmul.f32 %v361, %v372
    %v374 = vadd.f32 %v371, %v373
    %v375 = vstv %s39
    %v376 = vmul.f32 %v364, %v375
    %v377 = vadd.f32 %v374, %v376
    %v378 = vstv %s40
    %v379 = vmul.f32 %v367, %v378
    %v380 = vadd.f32 %v377, %v379
    %v381 = vmax.f32 %v380, 0.0
    %v382 = vstv %s41
    %v383 = vmul.f32 %v358, %v382
    %v384 = vstv %s118
    %v385 = vadd.f32 %v383, %v384
    %v386 = vstv %s42
    %v387 = vmul.f32 %v361, %v386
    %v388 = vadd.f32 %v385, %v387
    %v389 = vstv %s43
    %v390 = vmul.f32 %v364, %v389
    %v391 = vadd.f32 %v388, %v390
    %v392 = vstv %s44
    %v393 = vmul.f32 %v367, %v392
    %v394 = vadd.f32 %v391, %v393
    %v395 = vmax.f32 %v394, 0.0
    %v396 = vstv %s45
    %v397 = vmul.f32 %v358, %v396
    %v398 = vstv %s119
    %v399 = vadd.f32 %v397, %v398
    %v400 = vstv %s46
    %v401 = vmul.f32 %v361, %v400
    %v402 = vadd.f32 %v399, %v401
    %v403 = vstv %s47
    %v404 = vmul.f32 %v364, %v403
    %v405 = vadd.f32 %v402, %v404
    %v406 = vstv %s48
    %v407 = vmul.f32 %v367, %v406
    %v408 = vadd.f32 %v405, %v407
    %v409 = vmax.f32 %v408, 0.0
    %v410 = vstv %s49
    %v411 = vmul.f32 %v358, %v410
    %v412 = vstv %s120
    %v413 = vadd.f32 %v411, %v412
    %v414 = vstv %s50
    %v415 = vmul.f32 %v361, %v414
    %v416 = vadd.f32 %v413, %v415
    %v417 = vstv %s51
    %v418 = vmul.f32 %v364, %v417
    %v419 = vadd.f32 %v416, %v418
    %v420 = vstv %s52
    %v421 = vmul.f32 %v367, %v420
    %v422 = vadd.f32 %v419, %v421
    %v423 = vmax.f32 %v422, 0.0
    %v424 = vstv %s53
    %v425 = vmul.f32 %v358, %v424
    %v426 = vstv %s121
    %v427 = vadd.f32 %v425, %v426
    %v428 = vstv %s54
    %v429 = vmul.f32 %v361, %v428
    %v430 = vadd.f32 %v427, %v429
    %v431 = vstv %s55
    %v432 = vmul.f32 %v364, %v431
    %v433 = vadd.f32 %v430, %v432
    %v434 = vstv %s56
    %v435 = vmul.f32 %v367, %v434
    %v436 = vadd.f32 %v433, %v435
    %v437 = vmax.f32 %v436, 0.0
    %v438 = vstv %s57
    %v439 = vmul.f32 %v358, %v438
    %v440 = vstv %s122
    %v441 = vadd.f32 %v439, %v440
    %v442 = vstv %s58
    %v443 = vmul.f32 %v361, %v442
    %v444 = vadd.f32 %v441, %v443
    %v445 = vstv %s59
    %v446 = vmul.f32 %v364, %v445
    %v447 = vadd.f32 %v444, %v446
    %v448 = vstv %s60
    %v449 = vmul.f32 %v367, %v448
    %v450 = vadd.f32 %v447, %v449
    %v451 = vmax.f32 %v450, 0.0
    %v452 = vstv %s61
    %v453 = vmul.f32 %v358, %v452
    %v454 = vstv %s123
    %v455 = vadd.f32 %v453, %v454
    %v456 = vstv %s62
    %v457 = vmul.f32 %v361, %v456
    %v458 = vadd.f32 %v455, %v457
    %v459 = vstv %s63
    %v460 = vmul.f32 %v364, %v459
    %v461 = vadd.f32 %v458, %v460
    %v462 = vstv %s64
    %v463 = vmul.f32 %v367, %v462
    %v464 = vadd.f32 %v461, %v463
    %v465 = vmax.f32 %v464, 0.0
    %v466 = vstv %s65
    %v467 = vmul.f32 %v358, %v466
    %v468 = vstv %s124
    %v469 = vadd.f32 %v467, %v468
    %v470 = vstv %s66
    %v471 = vmul.f32 %v361, %v470
    %v472 = vadd.f32 %v469, %v471
    %v473 = vstv %s67
    %v474 = vmul.f32 %v364, %v473
    %v475 = vadd.f32 %v472, %v474
    %v476 = vstv %s68
    %v477 = vmul.f32 %v367, %v476
    %v478 = vadd.f32 %v475, %v477
    %v479 = vmax.f32 %v478, 0.0
    %v480 = vstv %s69
    %v481 = vmul.f32 %v358, %v480
    %v482 = vstv %s125
    %v483 = vadd.f32 %v481, %v482
    %v484 = vstv %s70
    %v485 = vmul.f32 %v361, %v484
    %v486 = vadd.f32 %v483, %v485
    %v487 = vstv %s71
    %v488 = vmul.f32 %v364, %v487
    %v489 = vadd.f32 %v486, %v488
    %v490 = vstv %s72
    %v491 = vmul.f32 %v367, %v490
    %v492 = vadd.f32 %v489, %v491
    %v493 = vmax.f32 %v492, 0.0
    %v494 = vstv %s73
    %v495 = vmul.f32 %v358, %v494
    %v496 = vstv %s126
    %v497 = vadd.f32 %v495, %v496
    %v498 = vstv %s74
    %v499 = vmul.f32 %v361, %v498
    %v500 = vadd.f32 %v497, %v499
    %v501 = vstv %s75
    %v502 = vmul.f32 %v364, %v501
    %v503 = vadd.f32 %v500, %v502
    %v504 = vstv %s76
    %v505 = vmul.f32 %v367, %v504
    %v506 = vadd.f32 %v503, %v505
    %v507 = vmax.f32 %v506, 0.0
    %v508 = vstv %s77
    %v509 = vmul.f32 %v358, %v508
    %v510 = vstv %s127
    %v511 = vadd.f32 %v509, %v510
    %v512 = vstv %s78
    %v513 = vmul.f32 %v361, %v512
    %v514 = vadd.f32 %v511, %v513
    %v515 = vstv %s79
    %v516 = vmul.f32 %v364, %v515
    %v517 = vadd.f32 %v514, %v516
    %v518 = vstv %s80
    %v519 = vmul.f32 %v367, %v518
    %v520 = vadd.f32 %v517, %v519
    %v521 = vmax.f32 %v520, 0.0
    %v522 = vstv %s81
    %v523 = vmul.f32 %v358, %v522
    %v524 = vstv %s128
    %v525 = vadd.f32 %v523, %v524
    %v526 = vstv %s82
    %v527 = vmul.f32 %v361, %v526
    %v528 = vadd.f32 %v525, %v527
    %v529 = vstv %s83
    %v530 = vmul.f32 %v364, %v529
    %v531 = vadd.f32 %v528, %v530
    %v532 = vstv %s84
    %v533 = vmul.f32 %v367, %v532
    %v534 = vadd.f32 %v531, %v533
    %v535 = vmax.f32 %v534, 0.0
    %v536 = vstv %s85
    %v537 = vmul.f32 %v358, %v536
    %v538 = vstv %s129
    %v539 = vadd.f32 %v537, %v538
    %v540 = vstv %s86
    %v541 = vmul.f32 %v361, %v540
    %v542 = vadd.f32 %v539, %v541
    %v543 = vstv %s87
    %v544 = vmul.f32 %v364, %v543
    %v545 = vadd.f32 %v542, %v544
    %v546 = vstv %s88
    %v547 = vmul.f32 %v367, %v546
    %v548 = vadd.f32 %v545, %v547
    %v549 = vmax.f32 %v548, 0.0
    %v550 = vstv %s89
    %v551 = vmul.f32 %v358, %v550
    %v552 = vstv %s130
    %v553 = vadd.f32 %v551, %v552
    %v554 = vstv %s90
    %v555 = vmul.f32 %v361, %v554
    %v556 = vadd.f32 %v553, %v555
    %v557 = vstv %s91
    %v558 = vmul.f32 %v364, %v557
    %v559 = vadd.f32 %v556, %v558
    %v560 = vstv %s92
    %v561 = vmul.f32 %v367, %v560
    %v562 = vadd.f32 %v559, %v561
    %v563 = vmax.f32 %v562, 0.0
    %v564 = vstv %s93
    %v565 = vmul.f32 %v358, %v564
    %v566 = vstv %s131
    %v567 = vadd.f32 %v565, %v566
    %v568 = vstv %s94
    %v569 = vmul.f32 %v361, %v568
    %v570 = vadd.f32 %v567, %v569
    %v571 = vstv %s95
    %v572 = vmul.f32 %v364, %v571
    %v573 = vadd.f32 %v570, %v572
    %v574 = vstv %s96
    %v575 = vmul.f32 %v367, %v574
    %v576 = vadd.f32 %v573, %v575
    %v577 = vmax.f32 %v576, 0.0
    %v578 = vstv %s97
    %v579 = vmul.f32 %v358, %v578
    %v580 = vstv %s132
    %v581 = vadd.f32 %v579, %v580
    %v582 = vstv %s98
    %v583 = vmul.f32 %v361, %v582
    %v584 = vadd.f32 %v581, %v583
    %v585 = vstv %s99
    %v586 = vmul.f32 %v364, %v585
    %v587 = vadd.f32 %v584, %v586
    %v588 = vstv %s100
    %v589 = vmul.f32 %v367, %v588
    %v590 = vadd.f32 %v587, %v589
    %v591 = vmax.f32 %v590, 0.0
    %v592 = vstv %s101
    %v593 = vmul.f32 %v358, %v592
    %v594 = vstv %s133
    %v595 = vadd.f32 %v593, %v594
    %v596 = vstv %s102
    %v597 = vmul.f32 %v361, %v596
    %v598 = vadd.f32 %v595, %v597
    %v599 = vstv %s103
    %v600 = vmul.f32 %v364, %v599
    %v601 = vadd.f32 %v598, %v600
    %v602 = vstv %s104
    %v603 = vmul.f32 %v367, %v602
    %v604 = vadd.f32 %v601, %v603
    %v605 = vmax.f32 %v604, 0.0
    %v606 = vstv %s105
    %v607 = vmul.f32 %v358, %v606
    %v608 = vstv %s134
    %v609 = vadd.f32 %v607, %v608
    %v610 = vstv %s106
    %v611 = vmul.f32 %v361, %v610
    %v612 = vadd.f32 %v609, %v611
    %v613 = vstv %s107
    %v614 = vmul.f32 %v364, %v613
    %v615 = vadd.f32 %v612, %v614
    %v616 = vstv %s108
    %v617 = vmul.f32 %v367, %v616
    %v618 = vadd.f32 %v615, %v617
    %v619 = vmax.f32 %v618, 0.0
    %v620 = vstv %s109
    %v621 = vmul.f32 %v358, %v620
    %v622 = vstv %s135
    %v623 = vadd.f32 %v621, %v622
    %v624 = vstv %s110
    %v625 = vmul.f32 %v361, %v624
    %v626 = vadd.f32 %v623, %v625
    %v627 = vstv %s111
    %v628 = vmul.f32 %v364, %v627
    %v629 = vadd.f32 %v626, %v628
    %v630 = vstv %s112
    %v631 = vmul.f32 %v367, %v630
    %v632 = vadd.f32 %v629, %v631
    %v633 = vmax.f32 %v632, 0.0
    %v634 = vstv %s113
    %v635 = vmul.f32 %v358, %v634
    %v636 = vstv %s136
    %v637 = vadd.f32 %v635, %v636
    %v638 = vstv %s114
    %v639 = vmul.f32 %v361, %v638
    %v640 = vadd.f32 %v637, %v639
    %v641 = vstv %s115
    %v642 = vmul.f32 %v364, %v641
    %v643 = vadd.f32 %v640, %v642
    %v644 = vstv %s116
    %v645 = vmul.f32 %v367, %v644
    %v646 = vadd.f32 %v643, %v645
    %v647 = vmax.f32 %v646, 0.0
    %v648 = vstv %s137
    %v649 = vmul.f32 %v381, %v648
    %v650 = vstv %s337
    %v651 = vadd.f32 %v649, %v650
    %v652 = vstv %s138
    %v653 = vmul.f32 %v395, %v652
    %v654 = vadd.f32 %v651, %v653
    %v655 = vstv %s139
    %v656 = vmul.f32 %v409, %v655
    %v657 = vadd.f32 %v654, %v656
    %v658 = vstv %s140
    %v659 = vmul.f32 %v423, %v658
    %v660 = vadd.f32 %v657, %v659
    %v661 = vstv %s141
    %v662 = vmul.f32 %v437, %v661
    %v663 = vadd.f32 %v660, %v662
    %v664 = vstv %s142
    %v665 = vmul.f32 %v451, %v664
    %v666 = vadd.f32 %v663, %v665
    %v667 = vstv %s143
    %v668 = vmul.f32 %v465, %v667
    %v669 = vadd.f32 %v666, %v668
    %v670 = vstv %s144
    %v671 = vmul.f32 %v479, %v670
    %v672 = vadd.f32 %v669, %v671
    %v673 = vstv %s145
    %v674 = vmul.f32 %v493, %v673
    %v675 = vadd.f32 %v672, %v674
    %v676 = vstv %s146
    %v677 = vmul.f32 %v507, %v676
    %v678 = vadd.f32 %v675, %v677
    %v679 = vstv %s147
    %v680 = vmul.f32 %v521, %v679
    %v681 = vadd.f32 %v678, %v680
    %v682 = vstv %s148
    %v683 = vmul.f32 %v535, %v682
    %v684 = vadd.f32 %v681, %v683
    %v685 = vstv %s149
    %v686 = vmul.f32 %v549, %v685
    %v687 = vadd.f32 %v684, %v686
    %v688 = vstv %s150
    %v689 = vmul.f32 %v563, %v688
    %v690 = vadd.f32 %v687, %v689
    %v691 = vstv %s151
    %v692 = vmul.f32 %v577, %v691
    %v693 = vadd.f32 %v690, %v692
    %v694 = vstv %s152
    %v695 = vmul.f32 %v591, %v694
    %v696 = vadd.f32 %v693, %v695
    %v697 = vstv %s153
    %v698 = vmul.f32 %v605, %v697
    %v699 = vadd.f32 %v696, %v698
    %v700 = vstv %s154
    %v701 = vmul.f32 %v619, %v700
    %v702 = vadd.f32 %v699, %v701
    %v703 = vstv %s155
    %v704 = vmul.f32 %v633, %v703
    %v705 = vadd.f32 %v702, %v704
    %v706 = vstv %s156
    %v707 = vmul.f32 %v647, %v706
    %v708 = vadd.f32 %v705, %v707
    %v709 = vmax.f32 %v708, 0.0
    %v710 = vstv %s157
    %v711 = vmul.f32 %v381, %v710
    %v712 = vstv %s338
    %v713 = vadd.f32 %v711, %v712
    %v714 = vstv %s158
    %v715 = vmul.f32 %v395, %v714
    %v716 = vadd.f32 %v713, %v715
    %v717 = vstv %s159
    %v718 = vmul.f32 %v409, %v717
    %v719 = vadd.f32 %v716, %v718
    %v720 = vstv %s160
    %v721 = vmul.f32 %v423, %v720
    %v722 = vadd.f32 %v719, %v721
    %v723 = vstv %s161
    %v724 = vmul.f32 %v437, %v723
    %v725 = vadd.f32 %v722, %v724
    %v726 = vstv %s162
    %v727 = vmul.f32 %v451, %v726
    %v728 = vadd.f32 %v725, %v727
    %v729 = vstv %s163
    %v730 = vmul.f32 %v465, %v729
    %v731 = vadd.f32 %v728, %v730
    %v732 = vstv %s164
    %v733 = vmul.f32 %v479, %v732
    %v734 = vadd.f32 %v731, %v733
    %v735 = vstv %s165
    %v736 = vmul.f32 %v493, %v735
    %v737 = vadd.f32 %v734, %v736
    %v738 = vstv %s166
    %v739 = vmul.f32 %v507, %v738
    %v740 = vadd.f32 %v737, %v739
    %v741 = vstv %s167
    %v742 = vmul.f32 %v521, %v741
    %v743 = vadd.f32 %v740, %v742
    %v744 = vstv %s168
    %v745 = vmul.f32 %v535, %v744
    %v746 = vadd.f32 %v743, %v745
    %v747 = vstv %s169
    %v748 = vmul.f32 %v549, %v747
    %v749 = vadd.f32 %v746, %v748
    %v750 = vstv %s170
    %v751 = vmul.f32 %v563, %v750
    %v752 = vadd.f32 %v749, %v751
    %v753 = vstv %s171
    %v754 = vmul.f32 %v577, %v753
    %v755 = vadd.f32 %v752, %v754
    %v756 = vstv %s172
    %v757 = vmul.f32 %v591, %v756
    %v758 = vadd.f32 %v755, %v757
    %v759 = vstv %s173
    %v760 = vmul.f32 %v605, %v759
    %v761 = vadd.f32 %v758, %v760
    %v762 = vstv %s174
    %v763 = vmul.f32 %v619, %v762
    %v764 = vadd.f32 %v761, %v763
    %v765 = vstv %s175
    %v766 = vmul.f32 %v633, %v765
    %v767 = vadd.f32 %v764, %v766
    %v768 = vstv %s176
    %v769 = vmul.f32 %v647, %v768
    %v770 = vadd.f32 %v767, %v769
    %v771 = vmax.f32 %v770, 0.0
    %v772 = vstv %s177
    %v773 = vmul.f32 %v381, %v772
    %v774 = vstv %s339
    %v775 = vadd.f32 %v773, %v774
    %v776 = vstv %s178
    %v777 = vmul.f32 %v395, %v776
    %v778 = vadd.f32 %v775, %v777
    %v779 = vstv %s179
    %v780 = vmul.f32 %v409, %v779
    %v781 = vadd.f32 %v778, %v780
    %v782 = vstv %s180
    %v783 = vmul.f32 %v423, %v782
    %v784 = vadd.f32 %v781, %v783
    %v785 = vstv %s181
    %v786 = vmul.f32 %v437, %v785
    %v787 = vadd.f32 %v784, %v786
    %v788 = vstv %s182
    %v789 = vmul.f32 %v451, %v788
    %v790 = vadd.f32 %v787, %v789
    %v791 = vstv %s183
    %v792 = vmul.f32 %v465, %v791
    %v793 = vadd.f32 %v790, %v792
    %v794 = vstv %s184
    %v795 = vmul.f32 %v479, %v794
    %v796 = vadd.f32 %v793, %v795
    %v797 = vstv %s185
    %v798 = vmul.f32 %v493, %v797
    %v799 = vadd.f32 %v796, %v798
    %v800 = vstv %s186
    %v801 = vmul.f32 %v507, %v800
    %v802 = vadd.f32 %v799, %v801
    %v803 = vstv %s187
    %v804 = vmul.f32 %v521, %v803
    %v805 = vadd.f32 %v802, %v804
    %v806 = vstv %s188
    %v807 = vmul.f32 %v535, %v806
    %v808 = vadd.f32 %v805, %v807
    %v809 = vstv %s189
    %v810 = vmul.f32 %v549, %v809
    %v811 = vadd.f32 %v808, %v810
    %v812 = vstv %s190
    %v813 = vmul.f32 %v563, %v812
    %v814 = vadd.f32 %v811, %v813
    %v815 = vstv %s191
    %v816 = vmul.f32 %v577, %v815
    %v817 = vadd.f32 %v814, %v816
    %v818 = vstv %s192
    %v819 = vmul.f32 %v591, %v818
    %v820 = vadd.f32 %v817, %v819
    %v821 = vstv %s193
    %v822 = vmul.f32 %v605, %v821
    %v823 = vadd.f32 %v820, %v822
    %v824 = vstv %s194
    %v825 = vmul.f32 %v619, %v824
    %v826 = vadd.f32 %v823, %v825
    %v827 = vstv %s195
    %v828 = vmul.f32 %v633, %v827
    %v829 = vadd.f32 %v826, %v828
    %v830 = vstv %s196
    %v831 = vmul.f32 %v647, %v830
    %v832 = vadd.f32 %v829, %v831
    %v833 = vmax.f32 %v832, 0.0
    %v834 = vstv %s197
    %v835 = vmul.f32 %v381, %v834
    %v836 = vstv %s340
    %v837 = vadd.f32 %v835, %v836
    %v838 = vstv %s198
    %v839 = vmul.f32 %v395, %v838
    %v840 = vadd.f32 %v837, %v839
    %v841 = vstv %s199
    %v842 = vmul.f32 %v409, %v841
    %v843 = vadd.f32 %v840, %v842
    %v844 = vstv %s200
    %v845 = vmul.f32 %v423, %v844
    %v846 = vadd.f32 %v843, %v845
    %v847 = vstv %s201
    %v848 = vmul.f32 %v437, %v847
    %v849 = vadd.f32 %v846, %v848
    %v850 = vstv %s202
    %v851 = vmul.f32 %v451, %v850
    %v852 = vadd.f32 %v849, %v851
    %v853 = vstv %s203
    %v854 = vmul.f32 %v465, %v853
    %v855 = vadd.f32 %v852, %v854
    %v856 = vstv %s204
    %v857 = vmul.f32 %v479, %v856
    %v858 = vadd.f32 %v855, %v857
    %v859 = vstv %s205
    %v860 = vmul.f32 %v493, %v859
    %v861 = vadd.f32 %v858, %v860
    %v862 = vstv %s206
    %v863 = vmul.f32 %v507, %v862
    %v864 = vadd.f32 %v861, %v863
    %v865 = vstv %s207
    %v866 = vmul.f32 %v521, %v865
    %v867 = vadd.f32 %v864, %v866
    %v868 = vstv %s208
    %v869 = vmul.f32 %v535, %v868
    %v870 = vadd.f32 %v867, %v869
    %v871 = vstv %s209
    %v872 = vmul.f32 %v549, %v871
    %v873 = vadd.f32 %v870, %v872
    %v874 = vstv %s210
    %v875 = vmul.f32 %v563, %v874
    %v876 = vadd.f32 %v873, %v875
    %v877 = vstv %s211
    %v878 = vmul.f32 %v577, %v877
    %v879 = vadd.f32 %v876, %v878
    %v880 = vstv %s212
    %v881 = vmul.f32 %v591, %v880
    %v882 = vadd.f32 %v879, %v881
    %v883 = vstv %s213
    %v884 = vmul.f32 %v605, %v883
    %v885 = vadd.f32 %v882, %v884
    %v886 = vstv %s214
    %v887 = vmul.f32 %v619, %v886
    %v888 = vadd.f32 %v885, %v887
    %v889 = vstv %s215
    %v890 = vmul.f32 %v633, %v889
    %v891 = vadd.f32 %v888, %v890
    %v892 = vstv %s216
    %v893 = vmul.f32 %v647, %v892
    %v894 = vadd.f32 %v891, %v893
    %v895 = vmax.f32 %v894, 0.0
    %v896 = vstv %s217
    %v897 = vmul.f32 %v381, %v896
    %v898 = vstv %s341
    %v899 = vadd.f32 %v897, %v898
    %v900 = vstv %s218
    %v901 = vmul.f32 %v395, %v900
    %v902 = vadd.f32 %v899, %v901
    %v903 = vstv %s219
    %v904 = vmul.f32 %v409, %v903
    %v905 = vadd.f32 %v902, %v904
    %v906 = vstv %s220
    %v907 = vmul.f32 %v423, %v906
    %v908 = vadd.f32 %v905, %v907
    %v909 = vstv %s221
    %v910 = vmul.f32 %v437, %v909
    %v911 = vadd.f32 %v908, %v910
    %v912 = vstv %s222
    %v913 = vmul.f32 %v451, %v912
    %v914 = vadd.f32 %v911, %v913
    %v915 = vstv %s223
    %v916 = vmul.f32 %v465, %v915
    %v917 = vadd.f32 %v914, %v916
    %v918 = vstv %s224
    %v919 = vmul.f32 %v479, %v918
    %v920 = vadd.f32 %v917, %v919
    %v921 = vstv %s225
    %v922 = vmul.f32 %v493, %v921
    %v923 = vadd.f32 %v920, %v922
    %v924 = vstv %s226
    %v925 = vmul.f32 %v507, %v924
    %v926 = vadd.f32 %v923, %v925
    %v927 = vstv %s227
    %v928 = vmul.f32 %v521, %v927
    %v929 = vadd.f32 %v926, %v928
    %v930 = vstv %s228
    %v931 = vmul.f32 %v535, %v930
    %v932 = vadd.f32 %v929, %v931
    %v933 = vstv %s229
    %v934 = vmul.f32 %v549, %v933
    %v935 = vadd.f32 %v932, %v934
    %v936 = vstv %s230
    %v937 = vmul.f32 %v563, %v936
    %v938 = vadd.f32 %v935, %v937
    %v939 = vstv %s231
    %v940 = vmul.f32 %v577, %v939
    %v941 = vadd.f32 %v938, %v940
    %v942 = vstv %s232
    %v943 = vmul.f32 %v591, %v942
    %v944 = vadd.f32 %v941, %v943
    %v945 = vstv %s233
    %v946 = vmul.f32 %v605, %v945
    %v947 = vadd.f32 %v944, %v946
    %v948 = vstv %s234
    %v949 = vmul.f32 %v619, %v948
    %v950 = vadd.f32 %v947, %v949
    %v951 = vstv %s235
    %v952 = vmul.f32 %v633, %v951
    %v953 = vadd.f32 %v950, %v952
    %v954 = vstv %s236
    %v955 = vmul.f32 %v647, %v954
    %v956 = vadd.f32 %v953, %v955
    %v957 = vmax.f32 %v956, 0.0
    %v958 = vstv %s237
    %v959 = vmul.f32 %v381, %v958
    %v960 = vstv %s342
    %v961 = vadd.f32 %v959, %v960
    %v962 = vstv %s238
    %v963 = vmul.f32 %v395, %v962
    %v964 = vadd.f32 %v961, %v963
    %v965 = vstv %s239
    %v966 = vmul.f32 %v409, %v965
    %v967 = vadd.f32 %v964, %v966
    %v968 = vstv %s240
    %v969 = vmul.f32 %v423, %v968
    %v970 = vadd.f32 %v967, %v969
    %v971 = vstv %s241
    %v972 = vmul.f32 %v437, %v971
    %v973 = vadd.f32 %v970, %v972
    %v974 = vstv %s242
    %v975 = vmul.f32 %v451, %v974
    %v976 = vadd.f32 %v973, %v975
    %v977 = vstv %s243
    %v978 = vmul.f32 %v465, %v977
    %v979 = vadd.f32 %v976, %v978
    %v980 = vstv %s244
    %v981 = vmul.f32 %v479, %v980
    %v982 = vadd.f32 %v979, %v981
    %v983 = vstv %s245
    %v984 = vmul.f32 %v493, %v983
    %v985 = vadd.f32 %v982, %v984
    %v986 = vstv %s246
    %v987 = vmul.f32 %v507, %v986
    %v988 = vadd.f32 %v985, %v987
    %v989 = vstv %s247
    %v990 = vmul.f32 %v521, %v989
    %v991 = vadd.f32 %v988, %v990
    %v992 = vstv %s248
    %v993 = vmul.f32 %v535, %v992
    %v994 = vadd.f32 %v991, %v993
    %v995 = vstv %s249
    %v996 = vmul.f32 %v549, %v995
    %v997 = vadd.f32 %v994, %v996
    %v998 = vstv %s250
    %v999 = vmul.f32 %v563, %v998
    %v1000 = vadd.f32 %v997, %v999
    %v1001 = vstv %s251
    %v1002 = vmul.f32 %v577, %v1001
    %v1003 = vadd.f32 %v1000, %v1002
    %v1004 = vstv %s252
    %v1005 = vmul.f32 %v591, %v1004
    %v1006 = vadd.f32 %v1003, %v1005
    %v1007 = vstv %s253
    %v1008 = vmul.f32 %v605, %v1007
    %v1009 = vadd.f32 %v1006, %v1008
    %v1010 = vstv %s254
    %v1011 = vmul.f32 %v619, %v1010
    %v1012 = vadd.f32 %v1009, %v1011
    %v1013 = vstv %s255
    %v1014 = vmul.f32 %v633, %v1013
    %v1015 = vadd.f32 %v1012, %v1014
    %v1016 = vstv %s256
    %v1017 = vmul.f32 %v647, %v1016
    %v1018 = vadd.f32 %v1015, %v1017
    %v1019 = vmax.f32 %v1018, 0.0
    %v1020 = vstv %s257
    %v1021 = vmul.f32 %v381, %v1020
    %v1022 = vstv %s343
    %v1023 = vadd.f32 %v1021, %v1022
    %v1024 = vstv %s258
    %v1025 = vmul.f32 %v395, %v1024
    %v1026 = vadd.f32 %v1023, %v1025
    %v1027 = vstv %s259
    %v1028 = vmul.f32 %v409, %v1027
    %v1029 = vadd.f32 %v1026, %v1028
    %v1030 = vstv %s260
    %v1031 = vmul.f32 %v423, %v1030
    %v1032 = vadd.f32 %v1029, %v1031
    %v1033 = vstv %s261
    %v1034 = vmul.f32 %v437, %v1033
    %v1035 = vadd.f32 %v1032, %v1034
    %v1036 = vstv %s262
    %v1037 = vmul.f32 %v451, %v1036
    %v1038 = vadd.f32 %v1035, %v1037
    %v1039 = vstv %s263
    %v1040 = vmul.f32 %v465, %v1039
    %v1041 = vadd.f32 %v1038, %v1040
    %v1042 = vstv %s264
    %v1043 = vmul.f32 %v479, %v1042
    %v1044 = vadd.f32 %v1041, %v1043
    %v1045 = vstv %s265
    %v1046 = vmul.f32 %v493, %v1045
    %v1047 = vadd.f32 %v1044, %v1046
    %v1048 = vstv %s266
    %v1049 = vmul.f32 %v507, %v1048
    %v1050 = vadd.f32 %v1047, %v1049
    %v1051 = vstv %s267
    %v1052 = vmul.f32 %v521, %v1051
    %v1053 = vadd.f32 %v1050, %v1052
    %v1054 = vstv %s268
    %v1055 = vmul.f32 %v535, %v1054
    %v1056 = vadd.f32 %v1053, %v1055
    %v1057 = vstv %s269
    %v1058 = vmul.f32 %v549, %v1057
    %v1059 = vadd.f32 %v1056, %v1058
    %v1060 = vstv %s270
    %v1061 = vmul.f32 %v563, %v1060
    %v1062 = vadd.f32 %v1059, %v1061
    %v1063 = vstv %s271
    %v1064 = vmul.f32 %v577, %v1063
    %v1065 = vadd.f32 %v1062, %v1064
    %v1066 = vstv %s272
    %v1067 = vmul.f32 %v591, %v1066
    %v1068 = vadd.f32 %v1065, %v1067
    %v1069 = vstv %s273
    %v1070 = vmul.f32 %v605, %v1069
    %v1071 = vadd.f32 %v1068, %v1070
    %v1072 = vstv %s274
    %v1073 = vmul.f32 %v619, %v1072
    %v1074 = vadd.f32 %v1071, %v1073
    %v1075 = vstv %s275
    %v1076 = vmul.f32 %v633, %v1075
    %v1077 = vadd.f32 %v1074, %v1076
    %v1078 = vstv %s276
    %v1079 = vmul.f32 %v647, %v1078
    %v1080 = vadd.f32 %v1077, %v1079
    %v1081 = vmax.f32 %v1080, 0.0
    %v1082 = vstv %s277
    %v1083 = vmul.f32 %v381, %v1082
    %v1084 = vstv %s344
    %v1085 = vadd.f32 %v1083, %v1084
    %v1086 = vstv %s278
    %v1087 = vmul.f32 %v395, %v1086
    %v1088 = vadd.f32 %v1085, %v1087
    %v1089 = vstv %s279
    %v1090 = vmul.f32 %v409, %v1089
    %v1091 = vadd.f32 %v1088, %v1090
    %v1092 = vstv %s280
    %v1093 = vmul.f32 %v423, %v1092
    %v1094 = vadd.f32 %v1091, %v1093
    %v1095 = vstv %s281
    %v1096 = vmul.f32 %v437, %v1095
    %v1097 = vadd.f32 %v1094, %v1096
    %v1098 = vstv %s282
    %v1099 = vmul.f32 %v451, %v1098
    %v1100 = vadd.f32 %v1097, %v1099
    %v1101 = vstv %s283
    %v1102 = vmul.f32 %v465, %v1101
    %v1103 = vadd.f32 %v1100, %v1102
    %v1104 = vstv %s284
    %v1105 = vmul.f32 %v479, %v1104
    %v1106 = vadd.f32 %v1103, %v1105
    %v1107 = vstv %s285
    %v1108 = vmul.f32 %v493, %v1107
    %v1109 = vadd.f32 %v1106, %v1108
    %v1110 = vstv %s286
    %v1111 = vmul.f32 %v507, %v1110
    %v1112 = vadd.f32 %v1109, %v1111
    %v1113 = vstv %s287
    %v1114 = vmul.f32 %v521, %v1113
    %v1115 = vadd.f32 %v1112, %v1114
    %v1116 = vstv %s288
    %v1117 = vmul.f32 %v535, %v1116
    %v1118 = vadd.f32 %v1115, %v1117
    %v1119 = vstv %s289
    %v1120 = vmul.f32 %v549, %v1119
    %v1121 = vadd.f32 %v1118, %v1120
    %v1122 = vstv %s290
    %v1123 = vmul.f32 %v563, %v1122
    %v1124 = vadd.f32 %v1121, %v1123
    %v1125 = vstv %s291
    %v1126 = vmul.f32 %v577, %v1125
    %v1127 = vadd.f32 %v1124, %v1126
    %v1128 = vstv %s292
    %v1129 = vmul.f32 %v591, %v1128
    %v1130 = vadd.f32 %v1127, %v1129
    %v1131 = vstv %s293
    %v1132 = vmul.f32 %v605, %v1131
    %v1133 = vadd.f32 %v1130, %v1132
    %v1134 = vstv %s294
    %v1135 = vmul.f32 %v619, %v1134
    %v1136 = vadd.f32 %v1133, %v1135
    %v1137 = vstv %s295
    %v1138 = vmul.f32 %v633, %v1137
    %v1139 = vadd.f32 %v1136, %v1138
    %v1140 = vstv %s296
    %v1141 = vmul.f32 %v647, %v1140
    %v1142 = vadd.f32 %v1139, %v1141
    %v1143 = vmax.f32 %v1142, 0.0
    %v1144 = vstv %s297
    %v1145 = vmul.f32 %v381, %v1144
    %v1146 = vstv %s345
    %v1147 = vadd.f32 %v1145, %v1146
    %v1148 = vstv %s298
    %v1149 = vmul.f32 %v395, %v1148
    %v1150 = vadd.f32 %v1147, %v1149
    %v1151 = vstv %s299
    %v1152 = vmul.f32 %v409, %v1151
    %v1153 = vadd.f32 %v1150, %v1152
    %v1154 = vstv %s300
    %v1155 = vmul.f32 %v423, %v1154
    %v1156 = vadd.f32 %v1153, %v1155
    %v1157 = vstv %s301
    %v1158 = vmul.f32 %v437, %v1157
    %v1159 = vadd.f32 %v1156, %v1158
    %v1160 = vstv %s302
    %v1161 = vmul.f32 %v451, %v1160
    %v1162 = vadd.f32 %v1159, %v1161
    %v1163 = vstv %s303
    %v1164 = vmul.f32 %v465, %v1163
    %v1165 = vadd.f32 %v1162, %v1164
    %v1166 = vstv %s304
    %v1167 = vmul.f32 %v479, %v1166
    %v1168 = vadd.f32 %v1165, %v1167
    %v1169 = vstv %s305
    %v1170 = vmul.f32 %v493, %v1169
    %v1171 = vadd.f32 %v1168, %v1170
    %v1172 = vstv %s306
    %v1173 = vmul.f32 %v507, %v1172
    %v1174 = vadd.f32 %v1171, %v1173
    %v1175 = vstv %s307
    %v1176 = vmul.f32 %v521, %v1175
    %v1177 = vadd.f32 %v1174, %v1176
    %v1178 = vstv %s308
    %v1179 = vmul.f32 %v535, %v1178
    %v1180 = vadd.f32 %v1177, %v1179
    %v1181 = vstv %s309
    %v1182 = vmul.f32 %v549, %v1181
    %v1183 = vadd.f32 %v1180, %v1182
    %v1184 = vstv %s310
    %v1185 = vmul.f32 %v563, %v1184
    %v1186 = vadd.f32 %v1183, %v1185
    %v1187 = vstv %s311
    %v1188 = vmul.f32 %v577, %v1187
    %v1189 = vadd.f32 %v1186, %v1188
    %v1190 = vstv %s312
    %v1191 = vmul.f32 %v591, %v1190
    %v1192 = vadd.f32 %v1189, %v1191
    %v1193 = vstv %s313
    %v1194 = vmul.f32 %v605, %v1193
    %v1195 = vadd.f32 %v1192, %v1194
    %v1196 = vstv %s314
    %v1197 = vmul.f32 %v619, %v1196
    %v1198 = vadd.f32 %v1195, %v1197
    %v1199 = vstv %s315
    %v1200 = vmul.f32 %v633, %v1199
    %v1201 = vadd.f32 %v1198, %v1200
    %v1202 = vstv %s316
    %v1203 = vmul.f32 %v647, %v1202
    %v1204 = vadd.f32 %v1201, %v1203
    %v1205 = vmax.f32 %v1204, 0.0
    %v1206 = vstv %s317
    %v1207 = vmul.f32 %v381, %v1206
    %v1208 = vstv %s346
    %v1209 = vadd.f32 %v1207, %v1208
    %v1210 = vstv %s318
    %v1211 = vmul.f32 %v395, %v1210
    %v1212 = vadd.f32 %v1209, %v1211
    %v1213 = vstv %s319
    %v1214 = vmul.f32 %v409, %v1213
    %v1215 = vadd.f32 %v1212, %v1214
    %v1216 = vstv %s320
    %v1217 = vmul.f32 %v423, %v1216
    %v1218 = vadd.f32 %v1215, %v1217
    %v1219 = vstv %s321
    %v1220 = vmul.f32 %v437, %v1219
    %v1221 = vadd.f32 %v1218, %v1220
    %v1222 = vstv %s322
    %v1223 = vmul.f32 %v451, %v1222
    %v1224 = vadd.f32 %v1221, %v1223
    %v1225 = vstv %s323
    %v1226 = vmul.f32 %v465, %v1225
    %v1227 = vadd.f32 %v1224, %v1226
    %v1228 = vstv %s324
    %v1229 = vmul.f32 %v479, %v1228
    %v1230 = vadd.f32 %v1227, %v1229
    %v1231 = vstv %s325
    %v1232 = vmul.f32 %v493, %v1231
    %v1233 = vadd.f32 %v1230, %v1232
    %v1234 = vstv %s326
    %v1235 = vmul.f32 %v507, %v1234
    %v1236 = vadd.f32 %v1233, %v1235
    %v1237 = vstv %s327
    %v1238 = vmul.f32 %v521, %v1237
    %v1239 = vadd.f32 %v1236, %v1238
    %v1240 = vstv %s328
    %v1241 = vmul.f32 %v535, %v1240
    %v1242 = vadd.f32 %v1239, %v1241
    %v1243 = vstv %s329
    %v1244 = vmul.f32 %v549, %v1243
    %v1245 = vadd.f32 %v1242, %v1244
    %v1246 = vstv %s330
    %v1247 = vmul.f32 %v563, %v1246
    %v1248 = vadd.f32 %v1245, %v1247
    %v1249 = vstv %s331
    %v1250 = vmul.f32 %v577, %v1249
    %v1251 = vadd.f32 %v1248, %v1250
    %v1252 = vstv %s332
    %v1253 = vmul.f32 %v591, %v1252
    %v1254 = vadd.f32 %v1251, %v1253
    %v1255 = vstv %s333
    %v1256 = vmul.f32 %v605, %v1255
    %v1257 = vadd.f32 %v1254, %v1256
    %v1258 = vstv %s334
    %v1259 = vmul.f32 %v619, %v1258
    %v1260 = vadd.f32 %v1257, %v1259
    %v1261 = vstv %s335
    %v1262 = vmul.f32 %v633, %v1261
    %v1263 = vadd.f32 %v1260, %v1262
    %v1264 = vstv %s336
    %v1265 = vmul.f32 %v647, %v1264
    %v1266 = vadd.f32 %v1263, %v1265
    %v1267 = vmax.f32 %v1266, 0.0
    %v1268 = vstv %s347
    %v1269 = vmul.f32 %v709, %v1268
    %v1270 = vstv %s357
    %v1271 = vadd.f32 %v1269, %v1270
    %v1272 = vstv %s348
    %v1273 = vmul.f32 %v771, %v1272
    %v1274 = vadd.f32 %v1271, %v1273
    %v1275 = vstv %s349
    %v1276 = vmul.f32 %v833, %v1275
    %v1277 = vadd.f32 %v1274, %v1276
    %v1278 = vstv %s350
    %v1279 = vmul.f32 %v895, %v1278
    %v1280 = vadd.f32 %v1277, %v1279
    %v1281 = vstv %s351
    %v1282 = vmul.f32 %v957, %v1281
    %v1283 = vadd.f32 %v1280, %v1282
    %v1284 = vstv %s352
    %v1285 = vmul.f32 %v1019, %v1284
    %v1286 = vadd.f32 %v1283, %v1285
    %v1287 = vstv %s353
    %v1288 = vmul.f32 %v1081, %v1287
    %v1289 = vadd.f32 %v1286, %v1288
    %v1290 = vstv %s354
    %v1291 = vmul.f32 %v1143, %v1290
    %v1292 = vadd.f32 %v1289, %v1291
    %v1293 = vstv %s355
    %v1294 = vmul.f32 %v1205, %v1293
    %v1295 = vadd.f32 %v1292, %v1294
    %v1296 = vstv %s356
    %v1297 = vmul.f32 %v1267, %v1296
    %v1298 = vadd.f32 %v1295, %v1297
    %v1299 = vsub.f32 0.0, %v1298
    %v1300 = vmul.f32 %v1299, 1.442695
    %v1301 = vpow.pop %v1300
    %v1302 = vadd.f32 %v1301, 1.0
    %v1303 = vrcp.pop %v1302
    %1304 = vst [vmem:[#allocation7] sm:$0xff] %v1303
    // Predicated region
    $region18: #{tpu_custom_call.1} parent=1 // pred_check
      _
    $region19: #{tpu_custom_call.1} parent=1 // pred_check_branch
      %1306 = sbr.rel (0) target = $region21
    $region20: #{tpu_custom_call.1} parent=1 // pred_region
      %s1308 = ssub.s32 128, 128
      %1309 = vsyncadd [#allocation4], %s1308
      %s1311 = sshll.u32 [#allocation7], 4
      %s1312 = int_to_ptr.vmem [resolvable:$true] %s1311
      %1314 = dma.vmem_to_hbm [thread:$0]  %s1312, 128, %s2, [#allocation4]
    $region21: #{tpu_custom_call.1} parent=1 // pred_fallthru
      _
    // Predicated region
    $region22: #{tpu_custom_call.1} parent=1 // pred_check
      _
    $region23: #{tpu_custom_call.1} parent=1 // pred_check_branch
      %1316 = sbr.rel (0) target = $region25
    $region24: #{tpu_custom_call.1} parent=1 // pred_region
      %1317 = dma.done [#allocation4], 128
    $region25: #{tpu_custom_call.1} parent=1 // pred_fallthru
      _
    %1318 = vsyncpa [#allocation3], 1
    %1319 = vsyncpa [#allocation4], 1
    %1320 = vsyncpa [#allocation5], 1

</llo_original>
